<compile_context>
chip_gen: v7x
topology: tpu7x:2x2x1
jax: 0.10.0
libtpu: 0.0.40
codegen_flags: <defaults>
</compile_context>

<pallas_src>
import functools

import jax
import jax.numpy as jnp
from jax import lax
from jax.experimental import pallas as pl
from jax.experimental.pallas import tpu as pltpu


def _segment_loss_kernel(lo_ref, hi_ref,
                         pred_ref, y_ref, brow_ref, bcol_ref, srow_ref,
                         out_ref, acc_ref, *, gamma, lane):
    """Grid = (row_tiles [parallel], col_tiles [arbitrary / reduction, last])."""
    i = pl.program_id(0)
    j = pl.program_id(1)

    @pl.when(j == 0)
    def _():
        acc_ref[...] = jnp.zeros_like(acc_ref)

    # Column blocks outside [lo, hi] carry only zero-weight pairs for this row tile.
    in_band = jnp.logical_and(j >= lo_ref[i], j <= hi_ref[i])

    @pl.when(in_band)
    def _():
        tn = pred_ref.shape[1]
        brow = brow_ref[...]                                   # (tm, 1)  int32
        srow = srow_ref[...]                                   # (tm, 1)  f32
        int_gamma = float(gamma) == int(gamma)

        # Chunk the elementwise math over static, lane-aligned Ref slices so no
        # (tm, tn) f32 temporary ever exists; accumulate into the lane-dense scratch.
        for c in range(tn // lane):
            sl = slice(c * lane, (c + 1) * lane)
            x = pred_ref[:, sl].astype(jnp.float32)            # (tm, lane) logits
            y = y_ref[:, sl].astype(jnp.float32)               # (tm, lane) targets {0,1}
            bcol = bcol_ref[:, sl]                             # (1, lane)  int32

            # numerically stable BCE-with-logits using a single exp
            t = jnp.exp(-jnp.abs(x))
            bce = jnp.maximum(x, 0.0) - x * y + jnp.log1p(t)

            # pt = exp(-bce) in closed form for binary y:  pt_num / (1 + t)
            one_p_t = 1.0 + t
            sig_num = jnp.where(x >= 0.0, 1.0, t)              # numerator of sigmoid(x)
            pt_num = jnp.where(y > 0.5, sig_num, one_p_t - sig_num)
            pt = pt_num * pl.reciprocal(one_p_t, approx=True)  # EUP vrcp, off the VALU path

            one_m_pt = 1.0 - pt
            if int_gamma:
                mod = lax.integer_pow(one_m_pt, int(gamma))    # stays on the VPU
            else:
                mod = one_m_pt ** gamma

            # fused same-batch mask and per-row weight 1/(n_i^2 * B)
            w = jnp.where(brow == bcol, srow, 0.0)             # (tm, lane)
            acc_ref[...] = acc_ref[...] + w * (mod * bce)

    @pl.when(j == pl.num_programs(1) - 1)
    def _():
        # fold sublanes down to this row tile's (8, 128) partial; the tiny cross-tile
        # reduction happens in the JAX wrapper.
        sub = out_ref.shape[0]
        a = acc_ref[...]
        part = a[0:sub, :]
        for r in range(1, acc_ref.shape[0] // sub):
            part = part + a[r * sub:(r + 1) * sub, :]
        out_ref[...] = part


def _pick_tile(n, target, multiple):
    """Largest divisor of n that is <= target and a multiple of `multiple`;
    falls back to the full extent n (always a legal block)."""
    if n <= target:
        return n
    t = (target // multiple) * multiple
    while t >= multiple:
        if n % t == 0:
            return t
        t -= multiple
    return n


def segment_loss(y_seg_pred, y_seg, batch, gamma=2, tm=None, tn=None):
    """Pallas implementation of SegmentLoss.forward (fully jittable)."""
    N = y_seg_pred.shape[0]
    assert y_seg_pred.shape == (N, N) and y_seg.shape == (N, N) and batch.shape == (N,)

    batch = batch.astype(jnp.int32)

    # ---- on-device glue (no host roundtrip) ----
    num_batches = (jnp.max(batch) + 1).astype(jnp.float32)            # B = max(batch)+1
    counts = jnp.zeros((N,), jnp.int32).at[batch].add(1)              # n_i per batch id
    n_node = counts[batch].astype(jnp.float32)                        # n_{batch[a]} per node
    scale = 1.0 / (n_node * n_node * num_batches)                     # 1/(n_i^2 * B)

    # ---- pad to a lane/sublane-friendly square (covers bf16 (16,128) / int8 (32,128)) ----
    Np = max(128, ((N + 127) // 128) * 128)
    pad = Np - N
    pred = jnp.pad(y_seg_pred.astype(jnp.bfloat16), ((0, pad), (0, pad)))  # compressed stream
    targ = jnp.pad(y_seg.astype(jnp.int8), ((0, pad), (0, pad)))           # {0,1} exact in int8
    batch_p = jnp.pad(batch, (0, pad), constant_values=-1)                 # sentinel: never matches
    scale_p = jnp.pad(scale, (0, pad))                                     # zero weight for padding

    # ---- tile sizes ----
    if tm is None:
        # multiple of 32 (int8 packing) and at most Np//2 so v7x's 2 TCs both get row tiles
        tm = _pick_tile(Np, min(256, Np // 2), 32)
    if tn is None:
        tn = _pick_tile(Np, 2048, 128)
    assert Np % tm == 0 and Np % tn == 0 and tm % 32 == 0 and tn % 128 == 0
    lane, sub = 128, 8
    grid_m, grid_n = Np // tm, Np // tn

    brow = batch_p.reshape(Np, 1)
    bcol = batch_p.reshape(1, Np)
    srow = scale_p.reshape(Np, 1)

    # ---- per-row-tile column-block band [lo, hi]: tiles outside carry zero weight ----
    nodes = jnp.arange(N, dtype=jnp.int32)
    col_lo = jnp.full((N,), Np, jnp.int32).at[batch].min(nodes)       # first node of each batch id
    col_hi = jnp.full((N,), -1, jnp.int32).at[batch].max(nodes)       # last node of each batch id
    safe_b = jnp.clip(batch_p, 0, N - 1)
    node_lo = jnp.where(batch_p >= 0, col_lo[safe_b], Np)             # padded rows: empty band
    node_hi = jnp.where(batch_p >= 0, col_hi[safe_b], -1)
    lo_blk = (jnp.min(node_lo.reshape(grid_m, tm), axis=1) // tn).astype(jnp.int32)
    hi_blk = (jnp.max(node_hi.reshape(grid_m, tm), axis=1) // tn).astype(jnp.int32)

    def _col_block(j, lo, hi):
        lo_c = jnp.clip(lo, 0, grid_n - 1)
        hi_c = jnp.clip(hi, lo_c, grid_n - 1)
        # clamped => off-band steps repeat the previous block index => DMA is skipped
        return jnp.clip(j, lo_c, hi_c)

    def tile_map(i, j, lo, hi):
        return (i, _col_block(j, lo[i], hi[i]))

    def row_map(i, j, lo, hi):
        return (i, 0)

    def col_map(i, j, lo, hi):
        return (0, _col_block(j, lo[i], hi[i]))

    def out_map(i, j, lo, hi):
        return (i, 0)

    kernel = functools.partial(_segment_loss_kernel, gamma=float(gamma), lane=lane)

    cost = pl.CostEstimate(
        flops=int(25 * Np * Np),
        transcendentals=int(3 * Np * Np),
        bytes_accessed=int(Np * Np * 3 + Np * 12 + grid_m * sub * lane * 4),
    )

    partials = pl.pallas_call(
        kernel,
        out_shape=jax.ShapeDtypeStruct((grid_m * sub, lane), jnp.float32),
        grid_spec=pltpu.PrefetchScalarGridSpec(
            num_scalar_prefetch=2,                  # lo_blk, hi_blk -> SMEM, fed to index_maps
            grid=(grid_m, grid_n),                  # reduction (column) axis last
            in_specs=[
                pl.BlockSpec((tm, tn), tile_map),   # pred tile (bf16)
                pl.BlockSpec((tm, tn), tile_map),   # target tile (int8)
                pl.BlockSpec((tm, 1), row_map),     # batch id of row nodes
                pl.BlockSpec((1, tn), col_map),     # batch id of col nodes
                pl.BlockSpec((tm, 1), row_map),     # per-row weight 1/(n_i^2*B)
            ],
            out_specs=pl.BlockSpec((sub, lane), out_map),              # per-row-tile partial
            scratch_shapes=[pltpu.VMEM((tm, lane), jnp.float32)],      # lane-dense accumulator
        ),
        compiler_params=pltpu.CompilerParams(
            dimension_semantics=("parallel", "arbitrary"),   # row tiles shard across TCs (v7x)
        ),
        cost_estimate=cost,
    )(lo_blk, hi_blk, pred, targ, brow, bcol, srow)

    return jnp.sum(partials)


def _reference_segment_loss(y_seg_pred, y_seg, batch, gamma=2):
    """Pure-JAX mirror of the PyTorch loop, for verification."""
    pred = jnp.asarray(y_seg_pred, jnp.float32)
    y = jnp.asarray(y_seg, jnp.float32)
    batch = jnp.asarray(batch)
    num_batches = int(jax.device_get(jnp.max(batch))) + 1
    total = jnp.float32(0.0)
    for i in range(num_batches):
        idx = jnp.nonzero(batch == i)[0]
        sub_p = pred[jnp.ix_(idx, idx)].reshape(-1)
        sub_y = y[jnp.ix_(idx, idx)].reshape(-1)
        bce = jax.nn.softplus(sub_p) - sub_p * sub_y
        pt = jnp.exp(-bce)
        total = total + jnp.mean((1.0 - pt) ** gamma * bce)
    return total / num_batches


if __name__ == "__main__":
    key = jax.random.PRNGKey(0)
    k1, k2 = jax.random.split(key)

    # three graphs of 64 / 70 / 66 nodes => N = 200 total (padded to 256 inside the wrapper)
    sizes = (64, 70, 66)
    N = sum(sizes)
    batch = jnp.concatenate([jnp.full((s,), i, jnp.int32) for i, s in enumerate(sizes)])
    y_seg_pred = jax.random.normal(k1, (N, N), dtype=jnp.float32)        # pairwise logits
    y_seg = jax.random.bernoulli(k2, 0.3, (N, N)).astype(jnp.int32)      # pairwise labels

    ref = _reference_segment_loss(y_seg_pred, y_seg, batch, gamma=2)

    # default tiles
    loss_fn = jax.jit(functools.partial(segment_loss, gamma=2))
    out = jax.block_until_ready(loss_fn(y_seg_pred, y_seg, batch))
    # bf16 input streaming + approx reciprocal => relaxed (but still tight) tolerance
    assert jnp.allclose(out, ref, rtol=3e-2, atol=2e-3), (out, ref)

    # small explicit tiles: exercises grid_n > 1 and the off-band column-tile skipping
    loss_fn_small = jax.jit(functools.partial(segment_loss, gamma=2, tm=64, tn=128))
    out_small = jax.block_until_ready(loss_fn_small(y_seg_pred, y_seg, batch))
    assert jnp.allclose(out_small, ref, rtol=3e-2, atol=2e-3), (out_small, ref)

    print("KERNEL_OK")
</pallas_src>

<mosaic_0001>
module attributes {stable_mosaic.version = 11 : i64} {
  func.func @_segment_loss_kernel(%arg0: i32, %arg1: i32, %arg2: memref<2xi32, #tpu.memory_space<smem>>, %arg3: memref<2xi32, #tpu.memory_space<smem>>, %arg4: memref<128x256xbf16, #tpu.memory_space<vmem>>, %arg5: memref<128x256xi8, #tpu.memory_space<vmem>>, %arg6: memref<128x1xi32, #tpu.memory_space<vmem>>, %arg7: memref<1x256xi32, #tpu.memory_space<vmem>>, %arg8: memref<128x1xf32, #tpu.memory_space<vmem>>, %arg9: memref<8x128xf32, #tpu.memory_space<vmem>>, %arg10: memref<128x128xf32, #tpu.memory_space<vmem>>) attributes {dimension_semantics = [#tpu.dimension_semantics<parallel>, #tpu.dimension_semantics<arbitrary>], iteration_bounds = array<i64: 2, 1>, scalar_prefetch = 2 : i64, scratch_operands = 1 : i64, tpu.core_type = #tpu.core_type<tc>, window_params = [{transform_indices = @transform_0, window_bounds = array<i64: 128, 256>}, {transform_indices = @transform_1, window_bounds = array<i64: 128, 256>}, {transform_indices = @transform_2, window_bounds = array<i64: 128, 1>}, {transform_indices = @transform_3, window_bounds = array<i64: 1, 256>}, {transform_indices = @transform_4, window_bounds = array<i64: 128, 1>}, {transform_indices = @transform_5, window_bounds = array<i64: 8, 128>}]} {
    %c0_i32 = arith.constant 0 : i32
    %0 = arith.cmpi eq, %arg1, %c0_i32 : i32
    %1 = arith.extui %0 : i1 to i32
    %c0_i32_0 = arith.constant 0 : i32
    %2 = arith.cmpi ne, %1, %c0_i32_0 : i32
    scf.if %2 {
      %cst = arith.constant 0.000000e+00 : f32
      %15 = vector.broadcast %cst : f32 to vector<128x128xf32>
      %c0 = arith.constant 0 : index
      %c0_4 = arith.constant 0 : index
      %16 = vector.load %arg10[%c0, %c0_4] : memref<128x128xf32, #tpu.memory_space<vmem>>, vector<128x128xf32>
      tpu.vector_store %arg10[%c0, %c0_4], %15 {strides = array<i32>} : memref<128x128xf32, #tpu.memory_space<vmem>>, vector<128x128xf32>,
    } else {
    }
    %3 = arith.index_cast %arg0 : i32 to index
    %4 = memref.load %arg2[%3] : memref<2xi32, #tpu.memory_space<smem>>
    %5 = arith.cmpi sge, %arg1, %4 : i32
    %6 = arith.index_cast %arg0 : i32 to index
    %7 = memref.load %arg3[%6] : memref<2xi32, #tpu.memory_space<smem>>
    %8 = arith.cmpi sle, %arg1, %7 : i32
    %9 = arith.andi %5, %8 : i1
    %10 = arith.extui %9 : i1 to i32
    %c0_i32_1 = arith.constant 0 : i32
    %11 = arith.cmpi ne, %10, %c0_i32_1 : i32
    scf.if %11 {
      %c0 = arith.constant 0 : index
      %c0_4 = arith.constant 0 : index
      %15 = vector.load %arg6[%c0, %c0_4] : memref<128x1xi32, #tpu.memory_space<vmem>>, vector<128x1xi32>
      %c0_5 = arith.constant 0 : index
      %c0_6 = arith.constant 0 : index
      %16 = vector.load %arg8[%c0_5, %c0_6] : memref<128x1xf32, #tpu.memory_space<vmem>>, vector<128x1xf32>
      %c0_7 = arith.constant 0 : index
      %c0_8 = arith.constant 0 : index
      %17 = vector.load %arg4[%c0_7, %c0_8] : memref<128x256xbf16, #tpu.memory_space<vmem>>, vector<128x128xbf16>
      %18 = arith.extf %17 : vector<128x128xbf16> to vector<128x128xf32>
      %c0_9 = arith.constant 0 : index
      %c0_10 = arith.constant 0 : index
      %19 = vector.load %arg5[%c0_9, %c0_10] : memref<128x256xi8, #tpu.memory_space<vmem>>, vector<128x128xi8>
      %20 = arith.sitofp %19 : vector<128x128xi8> to vector<128x128xf32>
      %c0_11 = arith.constant 0 : index
      %c0_12 = arith.constant 0 : index
      %21 = vector.load %arg7[%c0_11, %c0_12] : memref<1x256xi32, #tpu.memory_space<vmem>>, vector<1x128xi32>
      %22 = math.absf %18 : vector<128x128xf32>
      %cst = arith.constant 0.000000e+00 : f32
      %23 = vector.broadcast %cst : f32 to vector<128x128xf32>
      %24 = arith.subf %23, %22 : vector<128x128xf32>
      %25 = math.exp %24 : vector<128x128xf32>
      %cst_13 = arith.constant 0.000000e+00 : f32
      %26 = vector.broadcast %cst_13 : f32 to vector<128x128xf32>
      %27 = arith.maximumf %18, %26 : vector<128x128xf32>
      %28 = arith.mulf %18, %20 : vector<128x128xf32>
      %29 = arith.subf %27, %28 : vector<128x128xf32>
      %30 = math.log1p %25 : vector<128x128xf32>
      %31 = arith.addf %29, %30 : vector<128x128xf32>
      %cst_14 = arith.constant 1.000000e+00 : f32
      %32 = vector.broadcast %cst_14 : f32 to vector<128x128xf32>
      %33 = arith.addf %32, %25 : vector<128x128xf32>
      %cst_15 = arith.constant 0.000000e+00 : f32
      %34 = vector.broadcast %cst_15 : f32 to vector<128x128xf32>
      %35 = arith.cmpf oge, %18, %34 : vector<128x128xf32>
      %cst_16 = arith.constant 1.000000e+00 : f32
      %36 = vector.broadcast %cst_16 : f32 to vector<128x128xf32>
      %37 = arith.select %35, %36, %25 : vector<128x128xi1>, vector<128x128xf32>
      %cst_17 = arith.constant 5.000000e-01 : f32
      %38 = vector.broadcast %cst_17 : f32 to vector<128x128xf32>
      %39 = arith.cmpf ogt, %20, %38 : vector<128x128xf32>
      %40 = arith.subf %33, %37 : vector<128x128xf32>
      %41 = arith.select %39, %37, %40 : vector<128x128xi1>, vector<128x128xf32>
      %42 = tpu.reciprocal %33 {approx = true} : vector<128x128xf32> -> vector<128x128xf32>
      %43 = arith.mulf %41, %42 : vector<128x128xf32>
      %cst_18 = arith.constant 1.000000e+00 : f32
      %44 = vector.broadcast %cst_18 : f32 to vector<128x128xf32>
      %45 = arith.subf %44, %43 : vector<128x128xf32>
      %46 = arith.mulf %45, %45 : vector<128x128xf32>
      %47 = vector.broadcast %15 : vector<128x1xi32> to vector<128x128xi32>
      %48 = vector.broadcast %21 : vector<1x128xi32> to vector<128x128xi32>
      %49 = arith.cmpi eq, %47, %48 : vector<128x128xi32>
      %cst_19 = arith.constant 0.000000e+00 : f32
      %50 = vector.shape_cast %16 : vector<128x1xf32> to vector<128x1xf32>
      %51 = vector.broadcast %50 : vector<128x1xf32> to vector<128x128xf32>
      %52 = vector.broadcast %cst_19 : f32 to vector<128x128xf32>
      %53 = arith.select %49, %51, %52 : vector<128x128xi1>, vector<128x128xf32>
      %c0_20 = arith.constant 0 : index
      %c0_21 = arith.constant 0 : index
      %54 = vector.load %arg10[%c0_20, %c0_21] : memref<128x128xf32, #tpu.memory_space<vmem>>, vector<128x128xf32>
      %55 = arith.mulf %46, %31 : vector<128x128xf32>
      %56 = arith.mulf %53, %55 : vector<128x128xf32>
      %57 = arith.addf %54, %56 : vector<128x128xf32>
      %c0_22 = arith.constant 0 : index
      %c0_23 = arith.constant 0 : index
      %58 = vector.load %arg10[%c0_22, %c0_23] : memref<128x128xf32, #tpu.memory_space<vmem>>, vector<128x128xf32>
      tpu.vector_store %arg10[%c0_22, %c0_23], %57 {strides = array<i32>} : memref<128x128xf32, #tpu.memory_space<vmem>>, vector<128x128xf32>,
      %c0_24 = arith.constant 0 : index
      %c128 = arith.constant 128 : index
      %59 = vector.load %arg4[%c0_24, %c128] : memref<128x256xbf16, #tpu.memory_space<vmem>>, vector<128x128xbf16>
      %60 = arith.extf %59 : vector<128x128xbf16> to vector<128x128xf32>
      %c0_25 = arith.constant 0 : index
      %c128_26 = arith.constant 128 : index
      %61 = vector.load %arg5[%c0_25, %c128_26] : memref<128x256xi8, #tpu.memory_space<vmem>>, vector<128x128xi8>
      %62 = arith.sitofp %61 : vector<128x128xi8> to vector<128x128xf32>
      %c0_27 = arith.constant 0 : index
      %c128_28 = arith.constant 128 : index
      %63 = vector.load %arg7[%c0_27, %c128_28] : memref<1x256xi32, #tpu.memory_space<vmem>>, vector<1x128xi32>
      %64 = math.absf %60 : vector<128x128xf32>
      %cst_29 = arith.constant 0.000000e+00 : f32
      %65 = vector.broadcast %cst_29 : f32 to vector<128x128xf32>
      %66 = arith.subf %65, %64 : vector<128x128xf32>
      %67 = math.exp %66 : vector<128x128xf32>
      %cst_30 = arith.constant 0.000000e+00 : f32
      %68 = vector.broadcast %cst_30 : f32 to vector<128x128xf32>
      %69 = arith.maximumf %60, %68 : vector<128x128xf32>
      %70 = arith.mulf %60, %62 : vector<128x128xf32>
      %71 = arith.subf %69, %70 : vector<128x128xf32>
      %72 = math.log1p %67 : vector<128x128xf32>
      %73 = arith.addf %71, %72 : vector<128x128xf32>
      %cst_31 = arith.constant 1.000000e+00 : f32
      %74 = vector.broadcast %cst_31 : f32 to vector<128x128xf32>
      %75 = arith.addf %74, %67 : vector<128x128xf32>
      %cst_32 = arith.constant 0.000000e+00 : f32
      %76 = vector.broadcast %cst_32 : f32 to vector<128x128xf32>
      %77 = arith.cmpf oge, %60, %76 : vector<128x128xf32>
      %cst_33 = arith.constant 1.000000e+00 : f32
      %78 = vector.broadcast %cst_33 : f32 to vector<128x128xf32>
      %79 = arith.select %77, %78, %67 : vector<128x128xi1>, vector<128x128xf32>
      %cst_34 = arith.constant 5.000000e-01 : f32
      %80 = vector.broadcast %cst_34 : f32 to vector<128x128xf32>
      %81 = arith.cmpf ogt, %62, %80 : vector<128x128xf32>
      %82 = arith.subf %75, %79 : vector<128x128xf32>
      %83 = arith.select %81, %79, %82 : vector<128x128xi1>, vector<128x128xf32>
      %84 = tpu.reciprocal %75 {approx = true} : vector<128x128xf32> -> vector<128x128xf32>
      %85 = arith.mulf %83, %84 : vector<128x128xf32>
      %cst_35 = arith.constant 1.000000e+00 : f32
      %86 = vector.broadcast %cst_35 : f32 to vector<128x128xf32>
      %87 = arith.subf %86, %85 : vector<128x128xf32>
      %88 = arith.mulf %87, %87 : vector<128x128xf32>
      %89 = vector.broadcast %15 : vector<128x1xi32> to vector<128x128xi32>
      %90 = vector.broadcast %63 : vector<1x128xi32> to vector<128x128xi32>
      %91 = arith.cmpi eq, %89, %90 : vector<128x128xi32>
      %cst_36 = arith.constant 0.000000e+00 : f32
      %92 = vector.shape_cast %16 : vector<128x1xf32> to vector<128x1xf32>
      %93 = vector.broadcast %92 : vector<128x1xf32> to vector<128x128xf32>
      %94 = vector.broadcast %cst_36 : f32 to vector<128x128xf32>
      %95 = arith.select %91, %93, %94 : vector<128x128xi1>, vector<128x128xf32>
      %c0_37 = arith.constant 0 : index
      %c0_38 = arith.constant 0 : index
      %96 = vector.load %arg10[%c0_37, %c0_38] : memref<128x128xf32, #tpu.memory_space<vmem>>, vector<128x128xf32>
      %97 = arith.mulf %88, %73 : vector<128x128xf32>
      %98 = arith.mulf %95, %97 : vector<128x128xf32>
      %99 = arith.addf %96, %98 : vector<128x128xf32>
      %c0_39 = arith.constant 0 : index
      %c0_40 = arith.constant 0 : index
      %100 = vector.load %arg10[%c0_39, %c0_40] : memref<128x128xf32, #tpu.memory_space<vmem>>, vector<128x128xf32>
      tpu.vector_store %arg10[%c0_39, %c0_40], %99 {strides = array<i32>} : memref<128x128xf32, #tpu.memory_space<vmem>>, vector<128x128xf32>,
    } else {
    }
    %c0_i32_2 = arith.constant 0 : i32
    %12 = arith.cmpi eq, %arg1, %c0_i32_2 : i32
    %13 = arith.extui %12 : i1 to i32
    %c0_i32_3 = arith.constant 0 : i32
    %14 = arith.cmpi ne, %13, %c0_i32_3 : i32
    scf.if %14 {
      %c0 = arith.constant 0 : index
      %c0_4 = arith.constant 0 : index
      %15 = vector.load %arg10[%c0, %c0_4] : memref<128x128xf32, #tpu.memory_space<vmem>>, vector<128x128xf32>
      %16 = vector.extract_strided_slice %15 {offsets = [0, 0], sizes = [8, 128], strides = [1, 1]} : vector<128x128xf32> to vector<8x128xf32>
      %17 = vector.extract_strided_slice %15 {offsets = [8, 0], sizes = [8, 128], strides = [1, 1]} : vector<128x128xf32> to vector<8x128xf32>
      %18 = arith.addf %16, %17 : vector<8x128xf32>
      %19 = vector.extract_strided_slice %15 {offsets = [16, 0], sizes = [8, 128], strides = [1, 1]} : vector<128x128xf32> to vector<8x128xf32>
      %20 = arith.addf %18, %19 : vector<8x128xf32>
      %21 = vector.extract_strided_slice %15 {offsets = [24, 0], sizes = [8, 128], strides = [1, 1]} : vector<128x128xf32> to vector<8x128xf32>
      %22 = arith.addf %20, %21 : vector<8x128xf32>
      %23 = vector.extract_strided_slice %15 {offsets = [32, 0], sizes = [8, 128], strides = [1, 1]} : vector<128x128xf32> to vector<8x128xf32>
      %24 = arith.addf %22, %23 : vector<8x128xf32>
      %25 = vector.extract_strided_slice %15 {offsets = [40, 0], sizes = [8, 128], strides = [1, 1]} : vector<128x128xf32> to vector<8x128xf32>
      %26 = arith.addf %24, %25 : vector<8x128xf32>
      %27 = vector.extract_strided_slice %15 {offsets = [48, 0], sizes = [8, 128], strides = [1, 1]} : vector<128x128xf32> to vector<8x128xf32>
      %28 = arith.addf %26, %27 : vector<8x128xf32>
      %29 = vector.extract_strided_slice %15 {offsets = [56, 0], sizes = [8, 128], strides = [1, 1]} : vector<128x128xf32> to vector<8x128xf32>
      %30 = arith.addf %28, %29 : vector<8x128xf32>
      %31 = vector.extract_strided_slice %15 {offsets = [64, 0], sizes = [8, 128], strides = [1, 1]} : vector<128x128xf32> to vector<8x128xf32>
      %32 = arith.addf %30, %31 : vector<8x128xf32>
      %33 = vector.extract_strided_slice %15 {offsets = [72, 0], sizes = [8, 128], strides = [1, 1]} : vector<128x128xf32> to vector<8x128xf32>
      %34 = arith.addf %32, %33 : vector<8x128xf32>
      %35 = vector.extract_strided_slice %15 {offsets = [80, 0], sizes = [8, 128], strides = [1, 1]} : vector<128x128xf32> to vector<8x128xf32>
      %36 = arith.addf %34, %35 : vector<8x128xf32>
      %37 = vector.extract_strided_slice %15 {offsets = [88, 0], sizes = [8, 128], strides = [1, 1]} : vector<128x128xf32> to vector<8x128xf32>
      %38 = arith.addf %36, %37 : vector<8x128xf32>
      %39 = vector.extract_strided_slice %15 {offsets = [96, 0], sizes = [8, 128], strides = [1, 1]} : vector<128x128xf32> to vector<8x128xf32>
      %40 = arith.addf %38, %39 : vector<8x128xf32>
      %41 = vector.extract_strided_slice %15 {offsets = [104, 0], sizes = [8, 128], strides = [1, 1]} : vector<128x128xf32> to vector<8x128xf32>
      %42 = arith.addf %40, %41 : vector<8x128xf32>
      %43 = vector.extract_strided_slice %15 {offsets = [112, 0], sizes = [8, 128], strides = [1, 1]} : vector<128x128xf32> to vector<8x128xf32>
      %44 = arith.addf %42, %43 : vector<8x128xf32>
      %45 = vector.extract_strided_slice %15 {offsets = [120, 0], sizes = [8, 128], strides = [1, 1]} : vector<128x128xf32> to vector<8x128xf32>
      %46 = arith.addf %44, %45 : vector<8x128xf32>
      %c0_5 = arith.constant 0 : index
      %c0_6 = arith.constant 0 : index
      %47 = vector.load %arg9[%c0_5, %c0_6] : memref<8x128xf32, #tpu.memory_space<vmem>>, vector<8x128xf32>
      tpu.vector_store %arg9[%c0_5, %c0_6], %46 {strides = array<i32>} : memref<8x128xf32, #tpu.memory_space<vmem>>, vector<8x128xf32>,
    } else {
    }
    return
  }
  func.func @transform_0(%arg0: i32, %arg1: i32, %arg2: memref<2xi32, #tpu.memory_space<smem>>, %arg3: memref<2xi32, #tpu.memory_space<smem>>) -> (i32, i32) {
    %0 = arith.index_cast %arg0 : i32 to index
    %1 = memref.load %arg2[%0] : memref<2xi32, #tpu.memory_space<smem>>
    %2 = arith.index_cast %arg0 : i32 to index
    %3 = memref.load %arg3[%2] : memref<2xi32, #tpu.memory_space<smem>>
    %c0_i32 = arith.constant 0 : i32
    %c0_i32_0 = arith.constant 0 : i32
    %4 = arith.maxsi %c0_i32, %1 : i32
    %5 = arith.minsi %c0_i32_0, %4 : i32
    %c0_i32_1 = arith.constant 0 : i32
    %6 = arith.maxsi %5, %3 : i32
    %7 = arith.minsi %c0_i32_1, %6 : i32
    %8 = arith.maxsi %5, %arg1 : i32
    %9 = arith.minsi %7, %8 : i32
    %c0_i32_2 = arith.constant 0 : i32
    return %arg0, %9 : i32, i32
  }
  func.func @transform_1(%arg0: i32, %arg1: i32, %arg2: memref<2xi32, #tpu.memory_space<smem>>, %arg3: memref<2xi32, #tpu.memory_space<smem>>) -> (i32, i32) {
    %0 = arith.index_cast %arg0 : i32 to index
    %1 = memref.load %arg2[%0] : memref<2xi32, #tpu.memory_space<smem>>
    %2 = arith.index_cast %arg0 : i32 to index
    %3 = memref.load %arg3[%2] : memref<2xi32, #tpu.memory_space<smem>>
    %c0_i32 = arith.constant 0 : i32
    %c0_i32_0 = arith.constant 0 : i32
    %4 = arith.maxsi %c0_i32, %1 : i32
    %5 = arith.minsi %c0_i32_0, %4 : i32
    %c0_i32_1 = arith.constant 0 : i32
    %6 = arith.maxsi %5, %3 : i32
    %7 = arith.minsi %c0_i32_1, %6 : i32
    %8 = arith.maxsi %5, %arg1 : i32
    %9 = arith.minsi %7, %8 : i32
    %c0_i32_2 = arith.constant 0 : i32
    return %arg0, %9 : i32, i32
  }
  func.func @transform_2(%arg0: i32, %arg1: i32, %arg2: memref<2xi32, #tpu.memory_space<smem>>, %arg3: memref<2xi32, #tpu.memory_space<smem>>) -> (i32, i32) {
    %c0_i32 = arith.constant 0 : i32
    %c0_i32_0 = arith.constant 0 : i32
    return %arg0, %c0_i32 : i32, i32
  }
  func.func @transform_3(%arg0: i32, %arg1: i32, %arg2: memref<2xi32, #tpu.memory_space<smem>>, %arg3: memref<2xi32, #tpu.memory_space<smem>>) -> (i32, i32) {
    %0 = arith.index_cast %arg0 : i32 to index
    %1 = memref.load %arg2[%0] : memref<2xi32, #tpu.memory_space<smem>>
    %2 = arith.index_cast %arg0 : i32 to index
    %3 = memref.load %arg3[%2] : memref<2xi32, #tpu.memory_space<smem>>
    %c0_i32 = arith.constant 0 : i32
    %c0_i32_0 = arith.constant 0 : i32
    %4 = arith.maxsi %c0_i32, %1 : i32
    %5 = arith.minsi %c0_i32_0, %4 : i32
    %c0_i32_1 = arith.constant 0 : i32
    %6 = arith.maxsi %5, %3 : i32
    %7 = arith.minsi %c0_i32_1, %6 : i32
    %8 = arith.maxsi %5, %arg1 : i32
    %9 = arith.minsi %7, %8 : i32
    %c0_i32_2 = arith.constant 0 : i32
    %c0_i32_3 = arith.constant 0 : i32
    return %c0_i32_2, %9 : i32, i32
  }
  func.func @transform_4(%arg0: i32, %arg1: i32, %arg2: memref<2xi32, #tpu.memory_space<smem>>, %arg3: memref<2xi32, #tpu.memory_space<smem>>) -> (i32, i32) {
    %c0_i32 = arith.constant 0 : i32
    %c0_i32_0 = arith.constant 0 : i32
    return %arg0, %c0_i32 : i32, i32
  }
  func.func @transform_5(%arg0: i32, %arg1: i32, %arg2: memref<2xi32, #tpu.memory_space<smem>>, %arg3: memref<2xi32, #tpu.memory_space<smem>>) -> (i32, i32) {
    %c0_i32 = arith.constant 0 : i32
    %c0_i32_0 = arith.constant 0 : i32
    return %arg0, %c0_i32 : i32, i32
  }
}

</mosaic_0001>

<llo_original>
// kernel: segment_loss.1
$region0: #{segment_loss.1}
  #allocation0 [shape = 'u32[]', space=smem, size = 0x4, offset = 0x4, fixed_abs, tag = 'smem constant byte address 0x4 - core index']
  #allocation1 [shape = 'u32[144,128]{1,0:T(1,128)}', space=vmem, size = 0x12000, scoped, tag = 'internal scratch']
  #allocation2 [shape = 'f32[128,128]{1,0:T(8,128)}', space=vmem, size = 0x10000, scoped, tag = 'scratch operand']
  #allocation3 [shape = 's32[1]{0}', space=sflag, size = 0x4, scoped, tag = 'scoped memory for segment_loss.1']
  #allocation4 [shape = 'u8[512]{0}', space=smem, size = 0x200, scoped, tag = 'prefetched SMEM operand 0']
  #allocation5 [shape = 'u8[512]{0}', space=smem, size = 0x200, scoped, tag = 'prefetched SMEM operand 1']
  %s0 = inlined_call_operand.vmem [shape: s32[2], index: 0, kind: input, shape index: {}]
  %s1 = inlined_call_operand.vmem [shape: s32[2], index: 1, kind: input, shape index: {}]
  %s2 = inlined_call_operand.vmem [shape: bf16[256,256], index: 2, kind: input, shape index: {}]
  %s3 = inlined_call_operand.vmem [shape: s8[256,256], index: 3, kind: input, shape index: {}]
  %s4 = inlined_call_operand.vmem [shape: s32[256,1], index: 4, kind: input, shape index: {}]
  %s5 = inlined_call_operand.vmem [shape: s32[1,256], index: 5, kind: input, shape index: {}]
  %s6 = inlined_call_operand.vmem [shape: f32[256,1], index: 6, kind: input, shape index: {}]
  %s7 = inlined_call_operand.vmem [shape: f32[16,128], index: 7, kind: output, shape index: {}]
  %s8 = sld [smem:[#allocation0]]
  $region65: #{segment_loss.1} parent=0
    _
  %s10 = ssub.s32 1, %s8
  %s11 = scalar_select 0, %s10, %s8
  %s12 = sshll.u32 %s0, 4
  %s13 = int_to_ptr.vmem [resolvable:$true] %s12
  %15 = dma.vmem_to_smem %s13, 16, [#allocation4], [#allocation3]
  %s16 = sshll.u32 %s1, 4
  %s17 = int_to_ptr.vmem [resolvable:$true] %s16
  %19 = dma.vmem_to_smem %s17, 16, [#allocation5], [#allocation3]
  %20 = dma.done [#allocation3], 32
  %21 = sfence
  loop: start=0, step=1, limit=4
  $region2: #{segment_loss.1} parent=0 // loop_pre_header
    _
  $region3: #{segment_loss.1} parent=0 // loop_header
    %s23 = sphi 0, %s27
    %p24 = scmp.ge.s32.totalorder %s23, 4
    %s30 = sphi 0, %s42
    %s31 = sphi 0, %s38
    %s32 = sphi 0, %s30
    %s33 = sphi 0, %s31
    %s34 = sphi 0, %s32
    %s35 = sphi 0, %s33
    %s75 = sphi 0, %s77
    %s78 = sphi 0, %s75
    %s79 = sphi 0, %s78
    %s95 = sphi 0, %s79
    %s131 = sphi 0, %s133
    %s134 = sphi 0, %s131
    %s135 = sphi 0, %s134
    %s151 = sphi 0, %s135
    %s157 = sphi 0, %s159
    %s160 = sphi 0, %s157
    %s161 = sphi 0, %s160
    %s177 = sphi 0, %s161
    %s211 = sphi 0, %s213
    %s214 = sphi 0, %s211
    %s215 = sphi 0, %s214
    %s231 = sphi 0, %s215
    %s237 = sphi 0, %s239
    %s240 = sphi 0, %s237
    %s241 = sphi 0, %s240
    %s257 = sphi 0, %s241
    %s263 = sphi 0, %s265
    %s266 = sphi 0, %s263
    %s267 = sphi 0, %s266
    %s283 = sphi 0, %s267
  $region4: #{segment_loss.1} parent=0 // loop_header_branch
    %26 = sbr.rel (%p24) target = $region8
  $region5: #{segment_loss.1} parent=0 // loop_body
    %s28 = ssub.s32 %s23, 1
    %s29 = ssub.s32 %s23, 2
    %s36 = sadd.s32 1, %s31
    %p37 = scmp.ge.s32.totalorder %s36, 1
    %s38 = scalar_select %p37, 0, %s36
    %s39 = sadd.s32 1, %s30
    %s40 = scalar_select %p37, %s39, %s30
    %p41 = scmp.ge.s32.totalorder %s40, 2
    %s42 = scalar_select %p41, 0, %s40
    %s43 = sld [smem:[#allocation4 + %s30]]
    %s44 = sld [smem:[#allocation5 + %s30]]
    %p45 = scmp.gt.s32.totalorder %s43, 0
    %s46 = scalar_select %p45, %s43, 0
    %p47 = scmp.lt.s32.totalorder %s46, 0
    %s48 = scalar_select %p47, %s46, 0
    %p49 = scmp.gt.s32.totalorder %s48, %s44
    %s50 = scalar_select %p49, %s48, %s44
    %p51 = scmp.lt.s32.totalorder %s50, 0
    %s52 = scalar_select %p51, %s50, 0
    %p53 = scmp.gt.s32.totalorder %s48, %s31
    %s54 = scalar_select %p53, %s48, %s31
    %p55 = scmp.lt.s32.totalorder %s52, %s54
    %s56 = scalar_select %p55, %s52, %s54
    %s57 = sld [smem:[#allocation4 + %s42]]
    %s58 = sld [smem:[#allocation5 + %s42]]
    %p59 = scmp.gt.s32.totalorder %s57, 0
    %s60 = scalar_select %p59, %s57, 0
    %p61 = scmp.lt.s32.totalorder %s60, 0
    %s62 = scalar_select %p61, %s60, 0
    %p63 = scmp.gt.s32.totalorder %s62, %s58
    %s64 = scalar_select %p63, %s62, %s58
    %p65 = scmp.lt.s32.totalorder %s64, 0
    %s66 = scalar_select %p65, %s64, 0
    %p67 = scmp.gt.s32.totalorder %s62, %s38
    %s68 = scalar_select %p67, %s62, %s38
    %p69 = scmp.lt.s32.totalorder %s66, %s68
    %s70 = scalar_select %p69, %s66, %s68
    %s71 = ssub.s32 %s30, %s42
    %s72 = ssub.s32 %s56, %s70
    %s73 = sor.u32 %s71, %s72
    %p74 = scmp.eq.s32.totalorder %s73, 0
    %s76 = sadd.s32 %s75, 1
    %s77 = scalar_select %p74, %s75, %s76
    %p80 = pneg %p74
    %p81 = scmp.eq.s32.totalorder %s23, 1
    %p82 = por %p80, %p81
    %p83 = scmp.ne.s32.totalorder %s75, %s78
    %p84 = scmp.eq.s32.totalorder %s23, 0
    %p85 = por %p83, %p84
    %p86 = scmp.ne.s32.totalorder %s75, %s78
    %p87 = scmp.eq.s32.totalorder %s28, 1
    %p88 = por %p86, %p87
    %p89 = scmp.ne.s32.totalorder %s78, %s79
    %p90 = scmp.eq.s32.totalorder %s28, 0
    %p91 = por %p89, %p90
    %p92 = scmp.ne.s32.totalorder %s78, %s79
    %p93 = scmp.eq.s32.totalorder %s29, 1
    %p94 = por %p92, %p93
    %p96 = scmp.ne.s32.totalorder %s79, %s95
    %p97 = scmp.eq.s32.totalorder %s29, 0
    %p98 = por %p96, %p97
    %s99 = sld [smem:[#allocation4 + %s30]]
    %s100 = sld [smem:[#allocation5 + %s30]]
    %p101 = scmp.gt.s32.totalorder %s99, 0
    %s102 = scalar_select %p101, %s99, 0
    %p103 = scmp.lt.s32.totalorder %s102, 0
    %s104 = scalar_select %p103, %s102, 0
    %p105 = scmp.gt.s32.totalorder %s104, %s100
    %s106 = scalar_select %p105, %s104, %s100
    %p107 = scmp.lt.s32.totalorder %s106, 0
    %s108 = scalar_select %p107, %s106, 0
    %p109 = scmp.gt.s32.totalorder %s104, %s31
    %s110 = scalar_select %p109, %s104, %s31
    %p111 = scmp.lt.s32.totalorder %s108, %s110
    %s112 = scalar_select %p111, %s108, %s110
    %s113 = sld [smem:[#allocation4 + %s42]]
    %s114 = sld [smem:[#allocation5 + %s42]]
    %p115 = scmp.gt.s32.totalorder %s113, 0
    %s116 = scalar_select %p115, %s113, 0
    %p117 = scmp.lt.s32.totalorder %s116, 0
    %s118 = scalar_select %p117, %s116, 0
    %p119 = scmp.gt.s32.totalorder %s118, %s114
    %s120 = scalar_select %p119, %s118, %s114
    %p121 = scmp.lt.s32.totalorder %s120, 0
    %s122 = scalar_select %p121, %s120, 0
    %p123 = scmp.gt.s32.totalorder %s118, %s38
    %s124 = scalar_select %p123, %s118, %s38
    %p125 = scmp.lt.s32.totalorder %s122, %s124
    %s126 = scalar_select %p125, %s122, %s124
    %s127 = ssub.s32 %s30, %s42
    %s128 = ssub.s32 %s112, %s126
    %s129 = sor.u32 %s127, %s128
    %p130 = scmp.eq.s32.totalorder %s129, 0
    %s132 = sadd.s32 %s131, 1
    %s133 = scalar_select %p130, %s131, %s132
    %p136 = pneg %p130
    %p137 = scmp.eq.s32.totalorder %s23, 1
    %p138 = por %p136, %p137
    %p139 = scmp.ne.s32.totalorder %s131, %s134
    %p140 = scmp.eq.s32.totalorder %s23, 0
    %p141 = por %p139, %p140
    %p142 = scmp.ne.s32.totalorder %s131, %s134
    %p143 = scmp.eq.s32.totalorder %s28, 1
    %p144 = por %p142, %p143
    %p145 = scmp.ne.s32.totalorder %s134, %s135
    %p146 = scmp.eq.s32.totalorder %s28, 0
    %p147 = por %p145, %p146
    %p148 = scmp.ne.s32.totalorder %s134, %s135
    %p149 = scmp.eq.s32.totalorder %s29, 1
    %p150 = por %p148, %p149
    %p152 = scmp.ne.s32.totalorder %s135, %s151
    %p153 = scmp.eq.s32.totalorder %s29, 0
    %p154 = por %p152, %p153
    %s155 = ssub.s32 %s30, %s42
    %p156 = scmp.eq.s32.totalorder %s155, 0
    %s158 = sadd.s32 %s157, 1
    %s159 = scalar_select %p156, %s157, %s158
    %p162 = pneg %p156
    %p163 = scmp.eq.s32.totalorder %s23, 1
    %p164 = por %p162, %p163
    %p165 = scmp.ne.s32.totalorder %s157, %s160
    %p166 = scmp.eq.s32.totalorder %s23, 0
    %p167 = por %p165, %p166
    %p168 = scmp.ne.s32.totalorder %s157, %s160
    %p169 = scmp.eq.s32.totalorder %s28, 1
    %p170 = por %p168, %p169
    %p171 = scmp.ne.s32.totalorder %s160, %s161
    %p172 = scmp.eq.s32.totalorder %s28, 0
    %p173 = por %p171, %p172
    %p174 = scmp.ne.s32.totalorder %s160, %s161
    %p175 = scmp.eq.s32.totalorder %s29, 1
    %p176 = por %p174, %p175
    %p178 = scmp.ne.s32.totalorder %s161, %s177
    %p179 = scmp.eq.s32.totalorder %s29, 0
    %p180 = por %p178, %p179
    %s181 = sld [smem:[#allocation4 + %s30]]
    %s182 = sld [smem:[#allocation5 + %s30]]
    %p183 = scmp.gt.s32.totalorder %s181, 0
    %s184 = scalar_select %p183, %s181, 0
    %p185 = scmp.lt.s32.totalorder %s184, 0
    %s186 = scalar_select %p185, %s184, 0
    %p187 = scmp.gt.s32.totalorder %s186, %s182
    %s188 = scalar_select %p187, %s186, %s182
    %p189 = scmp.lt.s32.totalorder %s188, 0
    %s190 = scalar_select %p189, %s188, 0
    %p191 = scmp.gt.s32.totalorder %s186, %s31
    %s192 = scalar_select %p191, %s186, %s31
    %p193 = scmp.lt.s32.totalorder %s190, %s192
    %s194 = scalar_select %p193, %s190, %s192
    %s195 = sld [smem:[#allocation4 + %s42]]
    %s196 = sld [smem:[#allocation5 + %s42]]
    %p197 = scmp.gt.s32.totalorder %s195, 0
    %s198 = scalar_select %p197, %s195, 0
    %p199 = scmp.lt.s32.totalorder %s198, 0
    %s200 = scalar_select %p199, %s198, 0
    %p201 = scmp.gt.s32.totalorder %s200, %s196
    %s202 = scalar_select %p201, %s200, %s196
    %p203 = scmp.lt.s32.totalorder %s202, 0
    %s204 = scalar_select %p203, %s202, 0
    %p205 = scmp.gt.s32.totalorder %s200, %s38
    %s206 = scalar_select %p205, %s200, %s38
    %p207 = scmp.lt.s32.totalorder %s204, %s206
    %s208 = scalar_select %p207, %s204, %s206
    %s209 = ssub.s32 %s194, %s208
    %p210 = scmp.eq.s32.totalorder %s209, 0
    %s212 = sadd.s32 %s211, 1
    %s213 = scalar_select %p210, %s211, %s212
    %p216 = pneg %p210
    %p217 = scmp.eq.s32.totalorder %s23, 1
    %p218 = por %p216, %p217
    %p219 = scmp.ne.s32.totalorder %s211, %s214
    %p220 = scmp.eq.s32.totalorder %s23, 0
    %p221 = por %p219, %p220
    %p222 = scmp.ne.s32.totalorder %s211, %s214
    %p223 = scmp.eq.s32.totalorder %s28, 1
    %p224 = por %p222, %p223
    %p225 = scmp.ne.s32.totalorder %s214, %s215
    %p226 = scmp.eq.s32.totalorder %s28, 0
    %p227 = por %p225, %p226
    %p228 = scmp.ne.s32.totalorder %s214, %s215
    %p229 = scmp.eq.s32.totalorder %s29, 1
    %p230 = por %p228, %p229
    %p232 = scmp.ne.s32.totalorder %s215, %s231
    %p233 = scmp.eq.s32.totalorder %s29, 0
    %p234 = por %p232, %p233
    %s235 = ssub.s32 %s30, %s42
    %p236 = scmp.eq.s32.totalorder %s235, 0
    %s238 = sadd.s32 %s237, 1
    %s239 = scalar_select %p236, %s237, %s238
    %p242 = pneg %p236
    %p243 = scmp.eq.s32.totalorder %s23, 1
    %p244 = por %p242, %p243
    %p245 = scmp.ne.s32.totalorder %s237, %s240
    %p246 = scmp.eq.s32.totalorder %s23, 0
    %p247 = por %p245, %p246
    %p248 = scmp.ne.s32.totalorder %s237, %s240
    %p249 = scmp.eq.s32.totalorder %s28, 1
    %p250 = por %p248, %p249
    %p251 = scmp.ne.s32.totalorder %s240, %s241
    %p252 = scmp.eq.s32.totalorder %s28, 0
    %p253 = por %p251, %p252
    %p254 = scmp.ne.s32.totalorder %s240, %s241
    %p255 = scmp.eq.s32.totalorder %s29, 1
    %p256 = por %p254, %p255
    %p258 = scmp.ne.s32.totalorder %s241, %s257
    %p259 = scmp.eq.s32.totalorder %s29, 0
    %p260 = por %p258, %p259
    %s261 = ssub.s32 %s30, %s42
    %p262 = scmp.eq.s32.totalorder %s261, 0
    %s264 = sadd.s32 %s263, 1
    %s265 = scalar_select %p262, %s263, %s264
    %p268 = pneg %p262
    %p269 = scmp.eq.s32.totalorder %s23, 1
    %p270 = por %p268, %p269
    %p271 = scmp.ne.s32.totalorder %s263, %s266
    %p272 = scmp.eq.s32.totalorder %s23, 0
    %p273 = por %p271, %p272
    %p274 = scmp.ne.s32.totalorder %s263, %s266
    %p275 = scmp.eq.s32.totalorder %s28, 1
    %p276 = por %p274, %p275
    %p277 = scmp.ne.s32.totalorder %s266, %s267
    %p278 = scmp.eq.s32.totalorder %s28, 0
    %p279 = por %p277, %p278
    %p280 = scmp.ne.s32.totalorder %s266, %s267
    %p281 = scmp.eq.s32.totalorder %s29, 1
    %p282 = por %p280, %p281
    %p284 = scmp.ne.s32.totalorder %s267, %s283
    %p285 = scmp.eq.s32.totalorder %s29, 0
    %p286 = por %p284, %p285
    %p287 = scmp.le.s32.totalorder 1, %s23
    %p288 = scmp.lt.s32.totalorder %s23, 3
    %p289 = pnand %p287, %p288
    %p290 = pneg %p289
    // Predicated region
    $region9: #{segment_loss.1} parent=5 // pred_check
      _
    $region10: #{segment_loss.1} parent=5 // pred_check_branch
      %292 = sbr.rel (%p289) target = $region12
    $region11: #{segment_loss.1} parent=5 // pred_region
      %s293 = ssub.s32 %s23, 1
    $region12: #{segment_loss.1} parent=5 // pred_fallthru
      _
    %p294 = scmp.lt.s32.totalorder %s23, 2
    // Predicated region
    $region13: #{segment_loss.1} parent=5 // pred_check
      %p295 = pneg %p294
    $region14: #{segment_loss.1} parent=5 // pred_check_branch
      %297 = sbr.rel (%p295) target = $region16
    $region15: #{segment_loss.1} parent=5 // pred_region
      // Predicated region
      $region17: #{segment_loss.1} parent=15 // pred_check
        %p298 = pneg %p85
      $region18: #{segment_loss.1} parent=15 // pred_check_branch
        %300 = sbr.rel (%p298) target = $region20
      $region19: #{segment_loss.1} parent=15 // pred_region
        %s301 = sld [smem:[#allocation4 + %s30]]
        %s302 = sld [smem:[#allocation5 + %s30]]
        %p303 = scmp.gt.s32.totalorder %s301, 0
        %s304 = scalar_select %p303, %s301, 0
        %p305 = scmp.lt.s32.totalorder %s304, 0
        %s306 = scalar_select %p305, %s304, 0
        %p307 = scmp.gt.s32.totalorder %s306, %s302
        %s308 = scalar_select %p307, %s306, %s302
        %p309 = scmp.lt.s32.totalorder %s308, 0
        %s310 = scalar_select %p309, %s308, 0
        %p311 = scmp.gt.s32.totalorder %s306, %s31
        %s312 = scalar_select %p311, %s306, %s31
        %p313 = scmp.lt.s32.totalorder %s310, %s312
        %s314 = scalar_select %p313, %s310, %s312
        %s315 = smul.u32 16, %s30
        %s316 = smul.u32 2, %s314
        %p317 = scmp.lt.s32.totalorder %s315, 31
        %s318 = scalar_select %p317, %s315, 31
        %p319 = scmp.lt.s32.totalorder %s316, 1
        %s320 = scalar_select %p319, %s316, 1
        %s321 = smul.addr %s318, 2
        %s322 = sadd.s32 %s320, %s321
        %s323 = smul.addr %s322, 4
        %s324 = scalar_lea.vmem %s2, %s323
        %s325 = sld [smem:[#allocation4 + %s30]]
        %s326 = sld [smem:[#allocation5 + %s30]]
        %p327 = scmp.gt.s32.totalorder %s325, 0
        %s328 = scalar_select %p327, %s325, 0
        %p329 = scmp.lt.s32.totalorder %s328, 0
        %s330 = scalar_select %p329, %s328, 0
        %p331 = scmp.gt.s32.totalorder %s330, %s326
        %s332 = scalar_select %p331, %s330, %s326
        %p333 = scmp.lt.s32.totalorder %s332, 0
        %s334 = scalar_select %p333, %s332, 0
        %p335 = scmp.gt.s32.totalorder %s330, %s31
        %s336 = scalar_select %p335, %s330, %s31
        %p337 = scmp.lt.s32.totalorder %s334, %s336
        %s338 = scalar_select %p337, %s334, %s336
        %s339 = smul.u32 16, %s30
        %s340 = smul.u32 2, %s338
      $region20: #{segment_loss.1} parent=15 // pred_fallthru
        _
      // Predicated region
      $region21: #{segment_loss.1} parent=15 // pred_check
        %p341 = pneg %p141
      $region22: #{segment_loss.1} parent=15 // pred_check_branch
        %343 = sbr.rel (%p341) target = $region24
      $region23: #{segment_loss.1} parent=15 // pred_region
        %s344 = sld [smem:[#allocation4 + %s30]]
        %s345 = sld [smem:[#allocation5 + %s30]]
        %p346 = scmp.gt.s32.totalorder %s344, 0
        %s347 = scalar_select %p346, %s344, 0
        %p348 = scmp.lt.s32.totalorder %s347, 0
        %s349 = scalar_select %p348, %s347, 0
        %p350 = scmp.gt.s32.totalorder %s349, %s345
        %s351 = scalar_select %p350, %s349, %s345
        %p352 = scmp.lt.s32.totalorder %s351, 0
        %s353 = scalar_select %p352, %s351, 0
        %p354 = scmp.gt.s32.totalorder %s349, %s31
        %s355 = scalar_select %p354, %s349, %s31
        %p356 = scmp.lt.s32.totalorder %s353, %s355
        %s357 = scalar_select %p356, %s353, %s355
        %s358 = smul.u32 4, %s30
        %s359 = smul.u32 2, %s357
        %p360 = scmp.lt.s32.totalorder %s358, 7
        %s361 = scalar_select %p360, %s358, 7
        %p362 = scmp.lt.s32.totalorder %s359, 1
        %s363 = scalar_select %p362, %s359, 1
        %s364 = smul.addr %s361, 2
        %s365 = sadd.s32 %s363, %s364
        %s366 = smul.addr %s365, 8
        %s367 = scalar_lea.vmem %s3, %s366
        %s368 = sld [smem:[#allocation4 + %s30]]
        %s369 = sld [smem:[#allocation5 + %s30]]
        %p370 = scmp.gt.s32.totalorder %s368, 0
        %s371 = scalar_select %p370, %s368, 0
        %p372 = scmp.lt.s32.totalorder %s371, 0
        %s373 = scalar_select %p372, %s371, 0
        %p374 = scmp.gt.s32.totalorder %s373, %s369
        %s375 = scalar_select %p374, %s373, %s369
        %p376 = scmp.lt.s32.totalorder %s375, 0
        %s377 = scalar_select %p376, %s375, 0
        %p378 = scmp.gt.s32.totalorder %s373, %s31
        %s379 = scalar_select %p378, %s373, %s31
        %p380 = scmp.lt.s32.totalorder %s377, %s379
        %s381 = scalar_select %p380, %s377, %s379
        %s382 = smul.u32 4, %s30
        %s383 = smul.u32 2, %s381
      $region24: #{segment_loss.1} parent=15 // pred_fallthru
        _
      // Predicated region
      $region25: #{segment_loss.1} parent=15 // pred_check
        %p384 = pneg %p167
      $region26: #{segment_loss.1} parent=15 // pred_check_branch
        %386 = sbr.rel (%p384) target = $region28
      $region27: #{segment_loss.1} parent=15 // pred_region
        %s387 = smul.u32 16, %s30
        %p388 = scmp.lt.s32.totalorder %s387, 31
        %s389 = scalar_select %p388, %s387, 31
        %s390 = smul.addr %s389, 8
        %s391 = scalar_lea.vmem %s4, %s390
        %s392 = smul.u32 16, %s30
      $region28: #{segment_loss.1} parent=15 // pred_fallthru
        _
      // Predicated region
      $region29: #{segment_loss.1} parent=15 // pred_check
        %p393 = pneg %p221
      $region30: #{segment_loss.1} parent=15 // pred_check_branch
        %395 = sbr.rel (%p393) target = $region32
      $region31: #{segment_loss.1} parent=15 // pred_region
        %s396 = sld [smem:[#allocation4 + %s30]]
        %s397 = sld [smem:[#allocation5 + %s30]]
        %p398 = scmp.gt.s32.totalorder %s396, 0
        %s399 = scalar_select %p398, %s396, 0
        %p400 = scmp.lt.s32.totalorder %s399, 0
        %s401 = scalar_select %p400, %s399, 0
        %p402 = scmp.gt.s32.totalorder %s401, %s397
        %s403 = scalar_select %p402, %s401, %s397
        %p404 = scmp.lt.s32.totalorder %s403, 0
        %s405 = scalar_select %p404, %s403, 0
        %p406 = scmp.gt.s32.totalorder %s401, %s31
        %s407 = scalar_select %p406, %s401, %s31
        %p408 = scmp.lt.s32.totalorder %s405, %s407
        %s409 = scalar_select %p408, %s405, %s407
        %s410 = smul.u32 2, %s409
        %p411 = scmp.lt.s32.totalorder %s410, 1
        %s412 = scalar_select %p411, %s410, 1
        %s413 = scalar_lea.vmem %s5, %s412
        %s414 = sld [smem:[#allocation4 + %s30]]
        %s415 = sld [smem:[#allocation5 + %s30]]
        %p416 = scmp.gt.s32.totalorder %s414, 0
        %s417 = scalar_select %p416, %s414, 0
        %p418 = scmp.lt.s32.totalorder %s417, 0
        %s419 = scalar_select %p418, %s417, 0
        %p420 = scmp.gt.s32.totalorder %s419, %s415
        %s421 = scalar_select %p420, %s419, %s415
        %p422 = scmp.lt.s32.totalorder %s421, 0
        %s423 = scalar_select %p422, %s421, 0
        %p424 = scmp.gt.s32.totalorder %s419, %s31
        %s425 = scalar_select %p424, %s419, %s31
        %p426 = scmp.lt.s32.totalorder %s423, %s425
        %s427 = scalar_select %p426, %s423, %s425
        %s428 = smul.u32 2, %s427
      $region32: #{segment_loss.1} parent=15 // pred_fallthru
        _
      // Predicated region
      $region33: #{segment_loss.1} parent=15 // pred_check
        %p429 = pneg %p247
      $region34: #{segment_loss.1} parent=15 // pred_check_branch
        %431 = sbr.rel (%p429) target = $region36
      $region35: #{segment_loss.1} parent=15 // pred_region
        %s432 = smul.u32 16, %s30
        %p433 = scmp.lt.s32.totalorder %s432, 31
        %s434 = scalar_select %p433, %s432, 31
        %s435 = smul.addr %s434, 8
        %s436 = scalar_lea.vmem %s6, %s435
        %s437 = smul.u32 16, %s30
      $region36: #{segment_loss.1} parent=15 // pred_fallthru
        _
    $region16: #{segment_loss.1} parent=5 // pred_fallthru
      _
    %p438 = scmp.le.s32.totalorder 1, %s23
    %p439 = scmp.lt.s32.totalorder %s23, 3
    %p440 = pnand %p438, %p439
    %p441 = pneg %p440
    // Predicated region
    $region37: #{segment_loss.1} parent=5 // pred_check
      _
    $region38: #{segment_loss.1} parent=5 // pred_check_branch
      %443 = sbr.rel (%p440) target = $region40
    $region39: #{segment_loss.1} parent=5 // pred_region
      %s444 = ssub.s32 %s23, 1
      %s445 = sld [smem:[#allocation4 + %s32]]
      %s446 = sld [smem:[#allocation5 + %s32]]
      %p447 = scmp.gt.s32.totalorder %s445, 0
      %s448 = scalar_select %p447, %s445, 0
      %p449 = scmp.lt.s32.totalorder %s448, 0
      %s450 = scalar_select %p449, %s448, 0
      %p451 = scmp.gt.s32.totalorder %s450, %s446
      %s452 = scalar_select %p451, %s450, %s446
      %p453 = scmp.lt.s32.totalorder %s452, 0
      %s454 = scalar_select %p453, %s452, 0
      %p455 = scmp.gt.s32.totalorder %s450, %s33
      %s456 = scalar_select %p455, %s450, %s33
      %p457 = scmp.lt.s32.totalorder %s454, %s456
      %s458 = scalar_select %p457, %s454, %s456
      %s459 = smul.u32 16, %s32
      %s460 = smul.u32 2, %s458
      %p461 = scmp.lt.s32.totalorder %s459, 31
      %s462 = scalar_select %p461, %s459, 31
      %p463 = scmp.lt.s32.totalorder %s460, 1
      %s464 = scalar_select %p463, %s460, 1
      %s465 = smul.addr %s462, 2
      %s466 = sadd.s32 %s464, %s465
      %s467 = smul.addr %s466, 4
      %s468 = scalar_lea.vmem %s2, %s467
      %p469 = pneg %p91
      %p470 = pneg %p88
      %s471 = sld [smem:[#allocation4 + %s32]]
      %s472 = sld [smem:[#allocation5 + %s32]]
      %p473 = scmp.gt.s32.totalorder %s471, 0
      %s474 = scalar_select %p473, %s471, 0
      %p475 = scmp.lt.s32.totalorder %s474, 0
      %s476 = scalar_select %p475, %s474, 0
      %p477 = scmp.gt.s32.totalorder %s476, %s472
      %s478 = scalar_select %p477, %s476, %s472
      %p479 = scmp.lt.s32.totalorder %s478, 0
      %s480 = scalar_select %p479, %s478, 0
      %p481 = scmp.gt.s32.totalorder %s476, %s33
      %s482 = scalar_select %p481, %s476, %s33
      %p483 = scmp.lt.s32.totalorder %s480, %s482
      %s484 = scalar_select %p483, %s480, %s482
      %s485 = smul.u32 4, %s32
      %s486 = smul.u32 2, %s484
      %p487 = scmp.lt.s32.totalorder %s485, 7
      %s488 = scalar_select %p487, %s485, 7
      %p489 = scmp.lt.s32.totalorder %s486, 1
      %s490 = scalar_select %p489, %s486, 1
      %s491 = smul.addr %s488, 2
      %s492 = sadd.s32 %s490, %s491
      %s493 = smul.addr %s492, 8
      %s494 = scalar_lea.vmem %s3, %s493
      %p495 = pneg %p147
      %p496 = pneg %p144
      %s497 = smul.u32 16, %s32
      %p498 = scmp.lt.s32.totalorder %s497, 31
      %s499 = scalar_select %p498, %s497, 31
      %s500 = smul.addr %s499, 8
      %s501 = scalar_lea.vmem %s4, %s500
      %p502 = pneg %p173
      %p503 = pneg %p170
      %s504 = sld [smem:[#allocation4 + %s32]]
      %s505 = sld [smem:[#allocation5 + %s32]]
      %p506 = scmp.gt.s32.totalorder %s504, 0
      %s507 = scalar_select %p506, %s504, 0
      %p508 = scmp.lt.s32.totalorder %s507, 0
      %s509 = scalar_select %p508, %s507, 0
      %p510 = scmp.gt.s32.totalorder %s509, %s505
      %s511 = scalar_select %p510, %s509, %s505
      %p512 = scmp.lt.s32.totalorder %s511, 0
      %s513 = scalar_select %p512, %s511, 0
      %p514 = scmp.gt.s32.totalorder %s509, %s33
      %s515 = scalar_select %p514, %s509, %s33
      %p516 = scmp.lt.s32.totalorder %s513, %s515
      %s517 = scalar_select %p516, %s513, %s515
      %s518 = smul.u32 2, %s517
      %p519 = scmp.lt.s32.totalorder %s518, 1
      %s520 = scalar_select %p519, %s518, 1
      %s521 = scalar_lea.vmem %s5, %s520
      %p522 = pneg %p227
      %p523 = pneg %p224
      %s524 = smul.u32 16, %s32
      %p525 = scmp.lt.s32.totalorder %s524, 31
      %s526 = scalar_select %p525, %s524, 31
      %s527 = smul.addr %s526, 8
      %s528 = scalar_lea.vmem %s6, %s527
      %p529 = pneg %p253
      %p530 = pneg %p250
      %p531 = pneg %p279
      %p532 = pneg %p276
      %p533 = scmp.lt.s32.totalorder %s32, 1
      %s534 = scalar_select %p533, %s32, 1
      %s535 = smul.addr %s534, 8
      %s536 = scalar_lea.vmem %s7, %s535
      %s537 = sld [smem:[#allocation4 + %s32]]
      %s538 = sld [smem:[#allocation5 + %s32]]
      %p539 = scmp.gt.s32.totalorder %s537, 0
      %s540 = scalar_select %p539, %s537, 0
      %p541 = scmp.lt.s32.totalorder %s540, 0
      %s542 = scalar_select %p541, %s540, 0
      %p543 = scmp.gt.s32.totalorder %s542, %s538
      %s544 = scalar_select %p543, %s542, %s538
      %p545 = scmp.lt.s32.totalorder %s544, 0
      %s546 = scalar_select %p545, %s544, 0
      %p547 = scmp.gt.s32.totalorder %s542, %s33
      %s548 = scalar_select %p547, %s542, %s33
      %p549 = scmp.lt.s32.totalorder %s546, %s548
      %s550 = scalar_select %p549, %s546, %s548
      %s551 = smul.u32 16, %s32
      %s552 = smul.u32 2, %s550
      %p553 = scmp.lt.s32.totalorder %s551, 31
      %s554 = scalar_select %p553, %s551, 31
      %p555 = scmp.lt.s32.totalorder %s552, 1
      %s556 = scalar_select %p555, %s552, 1
      %s557 = smul.addr %s554, 2
      %s558 = sadd.s32 %s556, %s557
      %s559 = smul.addr %s558, 4
      %s560 = scalar_lea.vmem %s2, %s559
      %s561 = sld [smem:[#allocation4 + %s32]]
      %s562 = sld [smem:[#allocation5 + %s32]]
      %p563 = scmp.gt.s32.totalorder %s561, 0
      %s564 = scalar_select %p563, %s561, 0
      %p565 = scmp.lt.s32.totalorder %s564, 0
      %s566 = scalar_select %p565, %s564, 0
      %p567 = scmp.gt.s32.totalorder %s566, %s562
      %s568 = scalar_select %p567, %s566, %s562
      %p569 = scmp.lt.s32.totalorder %s568, 0
      %s570 = scalar_select %p569, %s568, 0
      %p571 = scmp.gt.s32.totalorder %s566, %s33
      %s572 = scalar_select %p571, %s566, %s33
      %p573 = scmp.lt.s32.totalorder %s570, %s572
      %s574 = scalar_select %p573, %s570, %s572
      %s575 = smul.u32 16, %s32
      %s576 = smul.u32 2, %s574
      %s577 = sld [smem:[#allocation4 + %s32]]
      %s578 = sld [smem:[#allocation5 + %s32]]
      %p579 = scmp.gt.s32.totalorder %s577, 0
      %s580 = scalar_select %p579, %s577, 0
      %p581 = scmp.lt.s32.totalorder %s580, 0
      %s582 = scalar_select %p581, %s580, 0
      %p583 = scmp.gt.s32.totalorder %s582, %s578
      %s584 = scalar_select %p583, %s582, %s578
      %p585 = scmp.lt.s32.totalorder %s584, 0
      %s586 = scalar_select %p585, %s584, 0
      %p587 = scmp.gt.s32.totalorder %s582, %s33
      %s588 = scalar_select %p587, %s582, %s33
      %p589 = scmp.lt.s32.totalorder %s586, %s588
      %s590 = scalar_select %p589, %s586, %s588
      %s591 = smul.u32 4, %s32
      %s592 = smul.u32 2, %s590
      %p593 = scmp.lt.s32.totalorder %s591, 7
      %s594 = scalar_select %p593, %s591, 7
      %p595 = scmp.lt.s32.totalorder %s592, 1
      %s596 = scalar_select %p595, %s592, 1
      %s597 = smul.addr %s594, 2
      %s598 = sadd.s32 %s596, %s597
      %s599 = smul.addr %s598, 8
      %s600 = scalar_lea.vmem %s3, %s599
      %s601 = sld [smem:[#allocation4 + %s32]]
      %s602 = sld [smem:[#allocation5 + %s32]]
      %p603 = scmp.gt.s32.totalorder %s601, 0
      %s604 = scalar_select %p603, %s601, 0
      %p605 = scmp.lt.s32.totalorder %s604, 0
      %s606 = scalar_select %p605, %s604, 0
      %p607 = scmp.gt.s32.totalorder %s606, %s602
      %s608 = scalar_select %p607, %s606, %s602
      %p609 = scmp.lt.s32.totalorder %s608, 0
      %s610 = scalar_select %p609, %s608, 0
      %p611 = scmp.gt.s32.totalorder %s606, %s33
      %s612 = scalar_select %p611, %s606, %s33
      %p613 = scmp.lt.s32.totalorder %s610, %s612
      %s614 = scalar_select %p613, %s610, %s612
      %s615 = smul.u32 4, %s32
      %s616 = smul.u32 2, %s614
      %s617 = smul.u32 16, %s32
      %p618 = scmp.lt.s32.totalorder %s617, 31
      %s619 = scalar_select %p618, %s617, 31
      %s620 = smul.addr %s619, 8
      %s621 = scalar_lea.vmem %s4, %s620
      %s622 = smul.u32 16, %s32
      %s623 = sld [smem:[#allocation4 + %s32]]
      %s624 = sld [smem:[#allocation5 + %s32]]
      %p625 = scmp.gt.s32.totalorder %s623, 0
      %s626 = scalar_select %p625, %s623, 0
      %p627 = scmp.lt.s32.totalorder %s626, 0
      %s628 = scalar_select %p627, %s626, 0
      %p629 = scmp.gt.s32.totalorder %s628, %s624
      %s630 = scalar_select %p629, %s628, %s624
      %p631 = scmp.lt.s32.totalorder %s630, 0
      %s632 = scalar_select %p631, %s630, 0
      %p633 = scmp.gt.s32.totalorder %s628, %s33
      %s634 = scalar_select %p633, %s628, %s33
      %p635 = scmp.lt.s32.totalorder %s632, %s634
      %s636 = scalar_select %p635, %s632, %s634
      %s637 = smul.u32 2, %s636
      %p638 = scmp.lt.s32.totalorder %s637, 1
      %s639 = scalar_select %p638, %s637, 1
      %s640 = scalar_lea.vmem %s5, %s639
      %s641 = sld [smem:[#allocation4 + %s32]]
      %s642 = sld [smem:[#allocation5 + %s32]]
      %p643 = scmp.gt.s32.totalorder %s641, 0
      %s644 = scalar_select %p643, %s641, 0
      %p645 = scmp.lt.s32.totalorder %s644, 0
      %s646 = scalar_select %p645, %s644, 0
      %p647 = scmp.gt.s32.totalorder %s646, %s642
      %s648 = scalar_select %p647, %s646, %s642
      %p649 = scmp.lt.s32.totalorder %s648, 0
      %s650 = scalar_select %p649, %s648, 0
      %p651 = scmp.gt.s32.totalorder %s646, %s33
      %s652 = scalar_select %p651, %s646, %s33
      %p653 = scmp.lt.s32.totalorder %s650, %s652
      %s654 = scalar_select %p653, %s650, %s652
      %s655 = smul.u32 2, %s654
      %s656 = smul.u32 16, %s32
      %p657 = scmp.lt.s32.totalorder %s656, 31
      %s658 = scalar_select %p657, %s656, 31
      %s659 = smul.addr %s658, 8
      %s660 = scalar_lea.vmem %s6, %s659
      %s661 = smul.u32 16, %s32
      %p662 = scmp.lt.s32.totalorder %s32, 1
      %s663 = scalar_select %p662, %s32, 1
      %s664 = smul.addr %s663, 8
      %s665 = scalar_lea.vmem %s7, %s664
      %p666 = scmp.eq.s32.totalorder %s33, 0
      // Predicated region
      $region41: #{segment_loss.1} parent=39 // pred_check
        %p667 = pneg %p666
      $region42: #{segment_loss.1} parent=39 // pred_check_branch
        %669 = sbr.rel (%p667) target = $region44
      $region43: #{segment_loss.1} parent=39 // pred_region
        %670 = vst [vmem:[#allocation2] sm:$0xff] 0.0
        %671 = vst [vmem:[#allocation2 + $0x8] sm:$0xff] 0.0
        %672 = vst [vmem:[#allocation2 + $0x10] sm:$0xff] 0.0
        %673 = vst [vmem:[#allocation2 + $0x18] sm:$0xff] 0.0
        %674 = vst [vmem:[#allocation2 + $0x20] sm:$0xff] 0.0
        %675 = vst [vmem:[#allocation2 + $0x28] sm:$0xff] 0.0
        %676 = vst [vmem:[#allocation2 + $0x30] sm:$0xff] 0.0
        %677 = vst [vmem:[#allocation2 + $0x38] sm:$0xff] 0.0
        %678 = vst [vmem:[#allocation2 + $0x40] sm:$0xff] 0.0
        %679 = vst [vmem:[#allocation2 + $0x48] sm:$0xff] 0.0
        %680 = vst [vmem:[#allocation2 + $0x50] sm:$0xff] 0.0
        %681 = vst [vmem:[#allocation2 + $0x58] sm:$0xff] 0.0
        %682 = vst [vmem:[#allocation2 + $0x60] sm:$0xff] 0.0
        %683 = vst [vmem:[#allocation2 + $0x68] sm:$0xff] 0.0
        %684 = vst [vmem:[#allocation2 + $0x70] sm:$0xff] 0.0
        %685 = vst [vmem:[#allocation2 + $0x78] sm:$0xff] 0.0
      $region44: #{segment_loss.1} parent=39 // pred_fallthru
        _
      %s686 = sld [smem:[#allocation4 + %s32]]
      %p687 = scmp.ge.s32.totalorder %s33, %s686
      %s688 = sld [smem:[#allocation5 + %s32]]
      %p689 = scmp.le.s32.totalorder %s33, %s688
      %p690 = pnand %p687, %p689
      %p691 = pneg %p690
      // Predicated region
      $region45: #{segment_loss.1} parent=39 // pred_check
        _
      $region46: #{segment_loss.1} parent=39 // pred_check_branch
        %693 = sbr.rel (%p690) target = $region48
      $region47: #{segment_loss.1} parent=39 // pred_region
        %v694 = vld [vmem:[%s621] sm:$0xff]
        %v695 = vld [vmem:[%s621 + $0x8] sm:$0xff]
        %v696 = vld [vmem:[%s621 + $0x10] sm:$0xff]
        %v697 = vld [vmem:[%s621 + $0x18] sm:$0xff]
        %v698 = vld [vmem:[%s621 + $0x20] sm:$0xff]
        %v699 = vld [vmem:[%s621 + $0x28] sm:$0xff]
        %v700 = vld [vmem:[%s621 + $0x30] sm:$0xff]
        %v701 = vld [vmem:[%s621 + $0x38] sm:$0xff]
        %v702 = vld [vmem:[%s621 + $0x40] sm:$0xff]
        %v703 = vld [vmem:[%s621 + $0x48] sm:$0xff]
        %v704 = vld [vmem:[%s621 + $0x50] sm:$0xff]
        %v705 = vld [vmem:[%s621 + $0x58] sm:$0xff]
        %v706 = vld [vmem:[%s621 + $0x60] sm:$0xff]
        %v707 = vld [vmem:[%s621 + $0x68] sm:$0xff]
        %v708 = vld [vmem:[%s621 + $0x70] sm:$0xff]
        %v709 = vld [vmem:[%s621 + $0x78] sm:$0xff]
        %v710 = vld [vmem:[%s660] sm:$0xff]
        %v711 = vld [vmem:[%s660 + $0x8] sm:$0xff]
        %v712 = vld [vmem:[%s660 + $0x10] sm:$0xff]
        %v713 = vld [vmem:[%s660 + $0x18] sm:$0xff]
        %v714 = vld [vmem:[%s660 + $0x20] sm:$0xff]
        %v715 = vld [vmem:[%s660 + $0x28] sm:$0xff]
        %v716 = vld [vmem:[%s660 + $0x30] sm:$0xff]
        %v717 = vld [vmem:[%s660 + $0x38] sm:$0xff]
        %v718 = vld [vmem:[%s660 + $0x40] sm:$0xff]
        %v719 = vld [vmem:[%s660 + $0x48] sm:$0xff]
        %v720 = vld [vmem:[%s660 + $0x50] sm:$0xff]
        %v721 = vld [vmem:[%s660 + $0x58] sm:$0xff]
        %v722 = vld [vmem:[%s660 + $0x60] sm:$0xff]
        %v723 = vld [vmem:[%s660 + $0x68] sm:$0xff]
        %v724 = vld [vmem:[%s660 + $0x70] sm:$0xff]
        %v725 = vld [vmem:[%s660 + $0x78] sm:$0xff]
        %v726 = vld [vmem:[%s560] sm:$0xf]
        %v727 = vld [vmem:[%s560 + $0x8] sm:$0xf]
        %v728 = vld [vmem:[%s560 + $0x10] sm:$0xf]
        %v729 = vld [vmem:[%s560 + $0x18] sm:$0xf]
        %v730 = vld [vmem:[%s560 + $0x20] sm:$0xf]
        %v731 = vld [vmem:[%s560 + $0x28] sm:$0xf]
        %v732 = vld [vmem:[%s560 + $0x30] sm:$0xf]
        %v733 = vld [vmem:[%s560 + $0x38] sm:$0xf]
        %v734 = vld [vmem:[%s560 + $0x40] sm:$0xf]
        %v735 = vld [vmem:[%s560 + $0x48] sm:$0xf]
        %v736 = vld [vmem:[%s560 + $0x50] sm:$0xf]
        %v737 = vld [vmem:[%s560 + $0x58] sm:$0xf]
        %v738 = vld [vmem:[%s560 + $0x60] sm:$0xf]
        %v739 = vld [vmem:[%s560 + $0x68] sm:$0xf]
        %v740 = vld [vmem:[%s560 + $0x70] sm:$0xf]
        %v741 = vld [vmem:[%s560 + $0x78] sm:$0xf]
        %v742 = vunpack.c.l.bf16 %v726
        %v743 = vunpack.c.l.bf16 %v727
        %v744 = vunpack.c.l.bf16 %v728
        %v745 = vunpack.c.l.bf16 %v729
        %v746 = vunpack.c.l.bf16 %v730
        %v747 = vunpack.c.l.bf16 %v731
        %v748 = vunpack.c.l.bf16 %v732
        %v749 = vunpack.c.l.bf16 %v733
        %v750 = vunpack.c.l.bf16 %v734
        %v751 = vunpack.c.l.bf16 %v735
        %v752 = vunpack.c.l.bf16 %v736
        %v753 = vunpack.c.l.bf16 %v737
        %v754 = vunpack.c.l.bf16 %v738
        %v755 = vunpack.c.l.bf16 %v739
        %v756 = vunpack.c.l.bf16 %v740
        %v757 = vunpack.c.l.bf16 %v741
        %v758 = vld [vmem:[%s600] sm:$0xff]
        %v759 = vld [vmem:[%s600 + $0x10] sm:$0xff]
        %v760 = vld [vmem:[%s600 + $0x20] sm:$0xff]
        %v761 = vld [vmem:[%s600 + $0x30] sm:$0xff]
        %v762 = vunpack.c.0.s8 %v758
        %v763 = vunpack.c.1.s8 %v758
        %v764 = vunpack.c.2.s8 %v758
        %v765 = vunpack.c.3.s8 %v758
        %v766 = vunpack.c.0.s8 %v759
        %v767 = vunpack.c.1.s8 %v759
        %v768 = vunpack.c.2.s8 %v759
        %v769 = vunpack.c.3.s8 %v759
        %v770 = vunpack.c.0.s8 %v760
        %v771 = vunpack.c.1.s8 %v760
        %v772 = vunpack.c.2.s8 %v760
        %v773 = vunpack.c.3.s8 %v760
        %v774 = vunpack.c.0.s8 %v761
        %v775 = vunpack.c.1.s8 %v761
        %v776 = vunpack.c.2.s8 %v761
        %v777 = vunpack.c.3.s8 %v761
        %v778 = vcvt.s32.f32 %v762
        %v779 = vcvt.s32.f32 %v763
        %v780 = vcvt.s32.f32 %v764
        %v781 = vcvt.s32.f32 %v765
        %v782 = vcvt.s32.f32 %v766
        %v783 = vcvt.s32.f32 %v767
        %v784 = vcvt.s32.f32 %v768
        %v785 = vcvt.s32.f32 %v769
        %v786 = vcvt.s32.f32 %v770
        %v787 = vcvt.s32.f32 %v771
        %v788 = vcvt.s32.f32 %v772
        %v789 = vcvt.s32.f32 %v773
        %v790 = vcvt.s32.f32 %v774
        %v791 = vcvt.s32.f32 %v775
        %v792 = vcvt.s32.f32 %v776
        %v793 = vcvt.s32.f32 %v777
        %v794 = vld [vmem:[%s640] sm:$0x1]
        %v795 = vand.u32 2147483647, %v742
        %v796 = vand.u32 2147483647, %v743
        %v797 = vand.u32 2147483647, %v744
        %v798 = vand.u32 2147483647, %v745
        %v799 = vand.u32 2147483647, %v746
        %v800 = vand.u32 2147483647, %v747
        %v801 = vand.u32 2147483647, %v748
        %v802 = vand.u32 2147483647, %v749
        %v803 = vand.u32 2147483647, %v750
        %v804 = vand.u32 2147483647, %v751
        %v805 = vand.u32 2147483647, %v752
        %v806 = vand.u32 2147483647, %v753
        %v807 = vand.u32 2147483647, %v754
        %v808 = vand.u32 2147483647, %v755
        %v809 = vand.u32 2147483647, %v756
        %v810 = vand.u32 2147483647, %v757
        %v811 = vsub.f32 0.0, %v795
        %v812 = vsub.f32 0.0, %v796
        %v813 = vsub.f32 0.0, %v797
        %v814 = vsub.f32 0.0, %v798
        %v815 = vsub.f32 0.0, %v799
        %v816 = vsub.f32 0.0, %v800
        %v817 = vsub.f32 0.0, %v801
        %v818 = vsub.f32 0.0, %v802
        %v819 = vsub.f32 0.0, %v803
        %v820 = vsub.f32 0.0, %v804
        %v821 = vsub.f32 0.0, %v805
        %v822 = vsub.f32 0.0, %v806
        %v823 = vsub.f32 0.0, %v807
        %v824 = vsub.f32 0.0, %v808
        %v825 = vsub.f32 0.0, %v809
        %v826 = vsub.f32 0.0, %v810
        %v827 = vmul.f32 %v811, 1.442695
        %v828 = vpow.pop %v827
        %v829 = vmul.f32 %v812, 1.442695
        %v830 = vpow.pop %v829
        %v831 = vmul.f32 %v813, 1.442695
        %v832 = vpow.pop %v831
        %v833 = vmul.f32 %v814, 1.442695
        %v834 = vpow.pop %v833
        %v835 = vmul.f32 %v815, 1.442695
        %v836 = vpow.pop %v835
        %v837 = vmul.f32 %v816, 1.442695
        %v838 = vpow.pop %v837
        %v839 = vmul.f32 %v817, 1.442695
        %v840 = vpow.pop %v839
        %v841 = vmul.f32 %v818, 1.442695
        %v842 = vpow.pop %v841
        %v843 = vmul.f32 %v819, 1.442695
        %v844 = vpow.pop %v843
        %v845 = vmul.f32 %v820, 1.442695
        %v846 = vpow.pop %v845
        %v847 = vmul.f32 %v821, 1.442695
        %v848 = vpow.pop %v847
        %v849 = vmul.f32 %v822, 1.442695
        %v850 = vpow.pop %v849
        %v851 = vmul.f32 %v823, 1.442695
        %v852 = vpow.pop %v851
        %v853 = vmul.f32 %v824, 1.442695
        %v854 = vpow.pop %v853
        %v855 = vmul.f32 %v825, 1.442695
        %v856 = vpow.pop %v855
        %v857 = vmul.f32 %v826, 1.442695
        %v858 = vpow.pop %v857
        %v859 = vmax.f32 %v742, 0.0
        %v860 = vmax.f32 %v743, 0.0
        %v861 = vmax.f32 %v744, 0.0
        %v862 = vmax.f32 %v745, 0.0
        %v863 = vmax.f32 %v746, 0.0
        %v864 = vmax.f32 %v747, 0.0
        %v865 = vmax.f32 %v748, 0.0
        %v866 = vmax.f32 %v749, 0.0
        %v867 = vmax.f32 %v750, 0.0
        %v868 = vmax.f32 %v751, 0.0
        %v869 = vmax.f32 %v752, 0.0
        %v870 = vmax.f32 %v753, 0.0
        %v871 = vmax.f32 %v754, 0.0
        %v872 = vmax.f32 %v755, 0.0
        %v873 = vmax.f32 %v756, 0.0
        %v874 = vmax.f32 %v757, 0.0
        %v875 = vmul.f32 %v742, %v778
        %v876 = vmul.f32 %v743, %v779
        %v877 = vmul.f32 %v744, %v780
        %v878 = vmul.f32 %v745, %v781
        %v879 = vmul.f32 %v746, %v782
        %v880 = vmul.f32 %v747, %v783
        %v881 = vmul.f32 %v748, %v784
        %v882 = vmul.f32 %v749, %v785
        %v883 = vmul.f32 %v750, %v786
        %v884 = vmul.f32 %v751, %v787
        %v885 = vmul.f32 %v752, %v788
        %v886 = vmul.f32 %v753, %v789
        %v887 = vmul.f32 %v754, %v790
        %v888 = vmul.f32 %v755, %v791
        %v889 = vmul.f32 %v756, %v792
        %v890 = vmul.f32 %v757, %v793
        %v891 = vsub.f32 %v859, %v875
        %v892 = vsub.f32 %v860, %v876
        %v893 = vsub.f32 %v861, %v877
        %v894 = vsub.f32 %v862, %v878
        %v895 = vsub.f32 %v863, %v879
        %v896 = vsub.f32 %v864, %v880
        %v897 = vsub.f32 %v865, %v881
        %v898 = vsub.f32 %v866, %v882
        %v899 = vsub.f32 %v867, %v883
        %v900 = vsub.f32 %v868, %v884
        %v901 = vsub.f32 %v869, %v885
        %v902 = vsub.f32 %v870, %v886
        %v903 = vsub.f32 %v871, %v887
        %v904 = vsub.f32 %v872, %v888
        %v905 = vsub.f32 %v873, %v889
        %v906 = vsub.f32 %v874, %v890
        %v907 = vadd.f32 %v828, 1.0
        %v908 = vlog2.pop %v907
        %v909 = vmul.f32 %v908, 0.6931472
        %v910 = vmul.f32 -0.5, %v828
        %v911 = vadd.f32 %v910, 1.0
        %v912 = vmul.f32 %v911, %v828
        %v913 = vand.u32 2147483647, %v828
        %vm914 = vcmp.lt.f32.partialorder %v913, 0.0004427343
        %v915 = vsel %vm914, %v912, %v909
        %v916 = vadd.f32 %v830, 1.0
        %v917 = vlog2.pop %v916
        %v918 = vmul.f32 %v917, 0.6931472
        %v919 = vmul.f32 -0.5, %v830
        %v920 = vadd.f32 %v919, 1.0
        %v921 = vmul.f32 %v920, %v830
        %v922 = vand.u32 2147483647, %v830
        %vm923 = vcmp.lt.f32.partialorder %v922, 0.0004427343
        %v924 = vsel %vm923, %v921, %v918
        %v925 = vadd.f32 %v832, 1.0
        %v926 = vlog2.pop %v925
        %v927 = vmul.f32 %v926, 0.6931472
        %v928 = vmul.f32 -0.5, %v832
        %v929 = vadd.f32 %v928, 1.0
        %v930 = vmul.f32 %v929, %v832
        %v931 = vand.u32 2147483647, %v832
        %vm932 = vcmp.lt.f32.partialorder %v931, 0.0004427343
        %v933 = vsel %vm932, %v930, %v927
        %v934 = vadd.f32 %v834, 1.0
        %v935 = vlog2.pop %v934
        %v936 = vmul.f32 %v935, 0.6931472
        %v937 = vmul.f32 -0.5, %v834
        %v938 = vadd.f32 %v937, 1.0
        %v939 = vmul.f32 %v938, %v834
        %v940 = vand.u32 2147483647, %v834
        %vm941 = vcmp.lt.f32.partialorder %v940, 0.0004427343
        %v942 = vsel %vm941, %v939, %v936
        %v943 = vadd.f32 %v836, 1.0
        %v944 = vlog2.pop %v943
        %v945 = vmul.f32 %v944, 0.6931472
        %v946 = vmul.f32 -0.5, %v836
        %v947 = vadd.f32 %v946, 1.0
        %v948 = vmul.f32 %v947, %v836
        %v949 = vand.u32 2147483647, %v836
        %vm950 = vcmp.lt.f32.partialorder %v949, 0.0004427343
        %v951 = vsel %vm950, %v948, %v945
        %v952 = vadd.f32 %v838, 1.0
        %v953 = vlog2.pop %v952
        %v954 = vmul.f32 %v953, 0.6931472
        %v955 = vmul.f32 -0.5, %v838
        %v956 = vadd.f32 %v955, 1.0
        %v957 = vmul.f32 %v956, %v838
        %v958 = vand.u32 2147483647, %v838
        %vm959 = vcmp.lt.f32.partialorder %v958, 0.0004427343
        %v960 = vsel %vm959, %v957, %v954
        %v961 = vadd.f32 %v840, 1.0
        %v962 = vlog2.pop %v961
        %v963 = vmul.f32 %v962, 0.6931472
        %v964 = vmul.f32 -0.5, %v840
        %v965 = vadd.f32 %v964, 1.0
        %v966 = vmul.f32 %v965, %v840
        %v967 = vand.u32 2147483647, %v840
        %vm968 = vcmp.lt.f32.partialorder %v967, 0.0004427343
        %v969 = vsel %vm968, %v966, %v963
        %v970 = vadd.f32 %v842, 1.0
        %v971 = vlog2.pop %v970
        %v972 = vmul.f32 %v971, 0.6931472
        %v973 = vmul.f32 -0.5, %v842
        %v974 = vadd.f32 %v973, 1.0
        %v975 = vmul.f32 %v974, %v842
        %v976 = vand.u32 2147483647, %v842
        %vm977 = vcmp.lt.f32.partialorder %v976, 0.0004427343
        %v978 = vsel %vm977, %v975, %v972
        %v979 = vadd.f32 %v844, 1.0
        %v980 = vlog2.pop %v979
        %v981 = vmul.f32 %v980, 0.6931472
        %v982 = vmul.f32 -0.5, %v844
        %v983 = vadd.f32 %v982, 1.0
        %v984 = vmul.f32 %v983, %v844
        %v985 = vand.u32 2147483647, %v844
        %vm986 = vcmp.lt.f32.partialorder %v985, 0.0004427343
        %v987 = vsel %vm986, %v984, %v981
        %v988 = vadd.f32 %v846, 1.0
        %v989 = vlog2.pop %v988
        %v990 = vmul.f32 %v989, 0.6931472
        %v991 = vmul.f32 -0.5, %v846
        %v992 = vadd.f32 %v991, 1.0
        %v993 = vmul.f32 %v992, %v846
        %v994 = vand.u32 2147483647, %v846
        %vm995 = vcmp.lt.f32.partialorder %v994, 0.0004427343
        %v996 = vsel %vm995, %v993, %v990
        %v997 = vadd.f32 %v848, 1.0
        %v998 = vlog2.pop %v997
        %v999 = vmul.f32 %v998, 0.6931472
        %v1000 = vmul.f32 -0.5, %v848
        %v1001 = vadd.f32 %v1000, 1.0
        %v1002 = vmul.f32 %v1001, %v848
        %v1003 = vand.u32 2147483647, %v848
        %vm1004 = vcmp.lt.f32.partialorder %v1003, 0.0004427343
        %v1005 = vsel %vm1004, %v1002, %v999
        %v1006 = vadd.f32 %v850, 1.0
        %v1007 = vlog2.pop %v1006
        %v1008 = vmul.f32 %v1007, 0.6931472
        %v1009 = vmul.f32 -0.5, %v850
        %v1010 = vadd.f32 %v1009, 1.0
        %v1011 = vmul.f32 %v1010, %v850
        %v1012 = vand.u32 2147483647, %v850
        %vm1013 = vcmp.lt.f32.partialorder %v1012, 0.0004427343
        %v1014 = vsel %vm1013, %v1011, %v1008
        %v1015 = vadd.f32 %v852, 1.0
        %v1016 = vlog2.pop %v1015
        %v1017 = vmul.f32 %v1016, 0.6931472
        %v1018 = vmul.f32 -0.5, %v852
        %v1019 = vadd.f32 %v1018, 1.0
        %v1020 = vmul.f32 %v1019, %v852
        %v1021 = vand.u32 2147483647, %v852
        %vm1022 = vcmp.lt.f32.partialorder %v1021, 0.0004427343
        %v1023 = vsel %vm1022, %v1020, %v1017
        %v1024 = vadd.f32 %v854, 1.0
        %v1025 = vlog2.pop %v1024
        %v1026 = vmul.f32 %v1025, 0.6931472
        %v1027 = vmul.f32 -0.5, %v854
        %v1028 = vadd.f32 %v1027, 1.0
        %v1029 = vmul.f32 %v1028, %v854
        %v1030 = vand.u32 2147483647, %v854
        %vm1031 = vcmp.lt.f32.partialorder %v1030, 0.0004427343
        %v1032 = vsel %vm1031, %v1029, %v1026
        %v1033 = vadd.f32 %v856, 1.0
        %v1034 = vlog2.pop %v1033
        %v1035 = vmul.f32 %v1034, 0.6931472
        %v1036 = vmul.f32 -0.5, %v856
        %v1037 = vadd.f32 %v1036, 1.0
        %v1038 = vmul.f32 %v1037, %v856
        %v1039 = vand.u32 2147483647, %v856
        %vm1040 = vcmp.lt.f32.partialorder %v1039, 0.0004427343
        %v1041 = vsel %vm1040, %v1038, %v1035
        %v1042 = vadd.f32 %v858, 1.0
        %v1043 = vlog2.pop %v1042
        %v1044 = vmul.f32 %v1043, 0.6931472
        %v1045 = vmul.f32 -0.5, %v858
        %v1046 = vadd.f32 %v1045, 1.0
        %v1047 = vmul.f32 %v1046, %v858
        %v1048 = vand.u32 2147483647, %v858
        %vm1049 = vcmp.lt.f32.partialorder %v1048, 0.0004427343
        %v1050 = vsel %vm1049, %v1047, %v1044
        %v1051 = vadd.f32 %v891, %v915
        %v1052 = vadd.f32 %v892, %v924
        %v1053 = vadd.f32 %v893, %v933
        %v1054 = vadd.f32 %v894, %v942
        %v1055 = vadd.f32 %v895, %v951
        %v1056 = vadd.f32 %v896, %v960
        %v1057 = vadd.f32 %v897, %v969
        %v1058 = vadd.f32 %v898, %v978
        %v1059 = vadd.f32 %v899, %v987
        %v1060 = vadd.f32 %v900, %v996
        %v1061 = vadd.f32 %v901, %v1005
        %v1062 = vadd.f32 %v902, %v1014
        %v1063 = vadd.f32 %v903, %v1023
        %v1064 = vadd.f32 %v904, %v1032
        %v1065 = vadd.f32 %v905, %v1041
        %v1066 = vadd.f32 %v906, %v1050
        %v1067 = vadd.f32 %v828, 1.0
        %v1068 = vadd.f32 %v830, 1.0
        %v1069 = vadd.f32 %v832, 1.0
        %v1070 = vadd.f32 %v834, 1.0
        %v1071 = vadd.f32 %v836, 1.0
        %v1072 = vadd.f32 %v838, 1.0
        %v1073 = vadd.f32 %v840, 1.0
        %v1074 = vadd.f32 %v842, 1.0
        %v1075 = vadd.f32 %v844, 1.0
        %v1076 = vadd.f32 %v846, 1.0
        %v1077 = vadd.f32 %v848, 1.0
        %v1078 = vadd.f32 %v850, 1.0
        %v1079 = vadd.f32 %v852, 1.0
        %v1080 = vadd.f32 %v854, 1.0
        %v1081 = vadd.f32 %v856, 1.0
        %v1082 = vadd.f32 %v858, 1.0
        %vm1083 = vcmp.ge.f32.partialorder %v742, 0.0
        %vm1084 = vcmp.ge.f32.partialorder %v743, 0.0
        %vm1085 = vcmp.ge.f32.partialorder %v744, 0.0
        %vm1086 = vcmp.ge.f32.partialorder %v745, 0.0
        %vm1087 = vcmp.ge.f32.partialorder %v746, 0.0
        %vm1088 = vcmp.ge.f32.partialorder %v747, 0.0
        %vm1089 = vcmp.ge.f32.partialorder %v748, 0.0
        %vm1090 = vcmp.ge.f32.partialorder %v749, 0.0
        %vm1091 = vcmp.ge.f32.partialorder %v750, 0.0
        %vm1092 = vcmp.ge.f32.partialorder %v751, 0.0
        %vm1093 = vcmp.ge.f32.partialorder %v752, 0.0
        %vm1094 = vcmp.ge.f32.partialorder %v753, 0.0
        %vm1095 = vcmp.ge.f32.partialorder %v754, 0.0
        %vm1096 = vcmp.ge.f32.partialorder %v755, 0.0
        %vm1097 = vcmp.ge.f32.partialorder %v756, 0.0
        %vm1098 = vcmp.ge.f32.partialorder %v757, 0.0
        %v1099 = vsel %vm1083, 1.0, %v828
        %v1100 = vsel %vm1084, 1.0, %v830
        %v1101 = vsel %vm1085, 1.0, %v832
        %v1102 = vsel %vm1086, 1.0, %v834
        %v1103 = vsel %vm1087, 1.0, %v836
        %v1104 = vsel %vm1088, 1.0, %v838
        %v1105 = vsel %vm1089, 1.0, %v840
        %v1106 = vsel %vm1090, 1.0, %v842
        %v1107 = vsel %vm1091, 1.0, %v844
        %v1108 = vsel %vm1092, 1.0, %v846
        %v1109 = vsel %vm1093, 1.0, %v848
        %v1110 = vsel %vm1094, 1.0, %v850
        %v1111 = vsel %vm1095, 1.0, %v852
        %v1112 = vsel %vm1096, 1.0, %v854
        %v1113 = vsel %vm1097, 1.0, %v856
        %v1114 = vsel %vm1098, 1.0, %v858
        %vm1115 = vcmp.gt.f32.partialorder %v778, 0.5
        %vm1116 = vcmp.gt.f32.partialorder %v779, 0.5
        %vm1117 = vcmp.gt.f32.partialorder %v780, 0.5
        %vm1118 = vcmp.gt.f32.partialorder %v781, 0.5
        %vm1119 = vcmp.gt.f32.partialorder %v782, 0.5
        %vm1120 = vcmp.gt.f32.partialorder %v783, 0.5
        %vm1121 = vcmp.gt.f32.partialorder %v784, 0.5
        %vm1122 = vcmp.gt.f32.partialorder %v785, 0.5
        %vm1123 = vcmp.gt.f32.partialorder %v786, 0.5
        %vm1124 = vcmp.gt.f32.partialorder %v787, 0.5
        %vm1125 = vcmp.gt.f32.partialorder %v788, 0.5
        %vm1126 = vcmp.gt.f32.partialorder %v789, 0.5
        %vm1127 = vcmp.gt.f32.partialorder %v790, 0.5
        %vm1128 = vcmp.gt.f32.partialorder %v791, 0.5
        %vm1129 = vcmp.gt.f32.partialorder %v792, 0.5
        %vm1130 = vcmp.gt.f32.partialorder %v793, 0.5
        %v1131 = vsub.f32 %v1067, %v1099
        %v1132 = vsub.f32 %v1068, %v1100
        %v1133 = vsub.f32 %v1069, %v1101
        %v1134 = vsub.f32 %v1070, %v1102
        %v1135 = vsub.f32 %v1071, %v1103
        %v1136 = vsub.f32 %v1072, %v1104
        %v1137 = vsub.f32 %v1073, %v1105
        %v1138 = vsub.f32 %v1074, %v1106
        %v1139 = vsub.f32 %v1075, %v1107
        %v1140 = vsub.f32 %v1076, %v1108
        %v1141 = vsub.f32 %v1077, %v1109
        %v1142 = vsub.f32 %v1078, %v1110
        %v1143 = vsub.f32 %v1079, %v1111
        %v1144 = vsub.f32 %v1080, %v1112
        %v1145 = vsub.f32 %v1081, %v1113
        %v1146 = vsub.f32 %v1082, %v1114
        %v1147 = vsel %vm1115, %v1099, %v1131
        %v1148 = vsel %vm1116, %v1100, %v1132
        %v1149 = vsel %vm1117, %v1101, %v1133
        %v1150 = vsel %vm1118, %v1102, %v1134
        %v1151 = vsel %vm1119, %v1103, %v1135
        %v1152 = vsel %vm1120, %v1104, %v1136
        %v1153 = vsel %vm1121, %v1105, %v1137
        %v1154 = vsel %vm1122, %v1106, %v1138
        %v1155 = vsel %vm1123, %v1107, %v1139
        %v1156 = vsel %vm1124, %v1108, %v1140
        %v1157 = vsel %vm1125, %v1109, %v1141
        %v1158 = vsel %vm1126, %v1110, %v1142
        %v1159 = vsel %vm1127, %v1111, %v1143
        %v1160 = vsel %vm1128, %v1112, %v1144
        %v1161 = vsel %vm1129, %v1113, %v1145
        %v1162 = vsel %vm1130, %v1114, %v1146
        %v1163 = vrcp.pop %v1067
        %v1164 = vrcp.pop %v1068
        %v1165 = vrcp.pop %v1069
        %v1166 = vrcp.pop %v1070
        %v1167 = vrcp.pop %v1071
        %v1168 = vrcp.pop %v1072
        %v1169 = vrcp.pop %v1073
        %v1170 = vrcp.pop %v1074
        %v1171 = vrcp.pop %v1075
        %v1172 = vrcp.pop %v1076
        %v1173 = vrcp.pop %v1077
        %v1174 = vrcp.pop %v1078
        %v1175 = vrcp.pop %v1079
        %v1176 = vrcp.pop %v1080
        %v1177 = vrcp.pop %v1081
        %v1178 = vrcp.pop %v1082
        %v1179 = vmul.f32 %v1147, %v1163
        %v1180 = vmul.f32 %v1148, %v1164
        %v1181 = vmul.f32 %v1149, %v1165
        %v1182 = vmul.f32 %v1150, %v1166
        %v1183 = vmul.f32 %v1151, %v1167
        %v1184 = vmul.f32 %v1152, %v1168
        %v1185 = vmul.f32 %v1153, %v1169
        %v1186 = vmul.f32 %v1154, %v1170
        %v1187 = vmul.f32 %v1155, %v1171
        %v1188 = vmul.f32 %v1156, %v1172
        %v1189 = vmul.f32 %v1157, %v1173
        %v1190 = vmul.f32 %v1158, %v1174
        %v1191 = vmul.f32 %v1159, %v1175
        %v1192 = vmul.f32 %v1160, %v1176
        %v1193 = vmul.f32 %v1161, %v1177
        %v1194 = vmul.f32 %v1162, %v1178
        %v1195 = vsub.f32 1.0, %v1179
        %v1196 = vsub.f32 1.0, %v1180
        %v1197 = vsub.f32 1.0, %v1181
        %v1198 = vsub.f32 1.0, %v1182
        %v1199 = vsub.f32 1.0, %v1183
        %v1200 = vsub.f32 1.0, %v1184
        %v1201 = vsub.f32 1.0, %v1185
        %v1202 = vsub.f32 1.0, %v1186
        %v1203 = vsub.f32 1.0, %v1187
        %v1204 = vsub.f32 1.0, %v1188
        %v1205 = vsub.f32 1.0, %v1189
        %v1206 = vsub.f32 1.0, %v1190
        %v1207 = vsub.f32 1.0, %v1191
        %v1208 = vsub.f32 1.0, %v1192
        %v1209 = vsub.f32 1.0, %v1193
        %v1210 = vsub.f32 1.0, %v1194
        %v1211 = vmul.f32 %v1195, %v1195
        %v1212 = vmul.f32 %v1196, %v1196
        %v1213 = vmul.f32 %v1197, %v1197
        %v1214 = vmul.f32 %v1198, %v1198
        %v1215 = vmul.f32 %v1199, %v1199
        %v1216 = vmul.f32 %v1200, %v1200
        %v1217 = vmul.f32 %v1201, %v1201
        %v1218 = vmul.f32 %v1202, %v1202
        %v1219 = vmul.f32 %v1203, %v1203
        %v1220 = vmul.f32 %v1204, %v1204
        %v1221 = vmul.f32 %v1205, %v1205
        %v1222 = vmul.f32 %v1206, %v1206
        %v1223 = vmul.f32 %v1207, %v1207
        %v1224 = vmul.f32 %v1208, %v1208
        %v1225 = vmul.f32 %v1209, %v1209
        %v1226 = vmul.f32 %v1210, %v1210
        %1227 = vset.pattern.permute.xlu0 0
        %1228 = vperm.xlu0 %1227, %v694
        %v1229 = vpop.permute.xlu0 %1228
        %1230 = vset.pattern.permute.xlu0 0
        %1231 = vperm.xlu0 %1230, %v695
        %v1232 = vpop.permute.xlu0 %1231
        %1233 = vset.pattern.permute.xlu0 0
        %1234 = vperm.xlu0 %1233, %v696
        %v1235 = vpop.permute.xlu0 %1234
        %1236 = vset.pattern.permute.xlu0 0
        %1237 = vperm.xlu0 %1236, %v697
        %v1238 = vpop.permute.xlu0 %1237
        %1239 = vset.pattern.permute.xlu0 0
        %1240 = vperm.xlu0 %1239, %v698
        %v1241 = vpop.permute.xlu0 %1240
        %1242 = vset.pattern.permute.xlu0 0
        %1243 = vperm.xlu0 %1242, %v699
        %v1244 = vpop.permute.xlu0 %1243
        %1245 = vset.pattern.permute.xlu0 0
        %1246 = vperm.xlu0 %1245, %v700
        %v1247 = vpop.permute.xlu0 %1246
        %1248 = vset.pattern.permute.xlu0 0
        %1249 = vperm.xlu0 %1248, %v701
        %v1250 = vpop.permute.xlu0 %1249
        %1251 = vset.pattern.permute.xlu0 0
        %1252 = vperm.xlu0 %1251, %v702
        %v1253 = vpop.permute.xlu0 %1252
        %1254 = vset.pattern.permute.xlu0 0
        %1255 = vperm.xlu0 %1254, %v703
        %v1256 = vpop.permute.xlu0 %1255
        %1257 = vset.pattern.permute.xlu0 0
        %1258 = vperm.xlu0 %1257, %v704
        %v1259 = vpop.permute.xlu0 %1258
        %1260 = vset.pattern.permute.xlu0 0
        %1261 = vperm.xlu0 %1260, %v705
        %v1262 = vpop.permute.xlu0 %1261
        %1263 = vset.pattern.permute.xlu0 0
        %1264 = vperm.xlu0 %1263, %v706
        %v1265 = vpop.permute.xlu0 %1264
        %1266 = vset.pattern.permute.xlu0 0
        %1267 = vperm.xlu0 %1266, %v707
        %v1268 = vpop.permute.xlu0 %1267
        %1269 = vset.pattern.permute.xlu0 0
        %1270 = vperm.xlu0 %1269, %v708
        %v1271 = vpop.permute.xlu0 %1270
        %1272 = vset.pattern.permute.xlu0 0
        %1273 = vperm.xlu0 %1272, %v709
        %v1274 = vpop.permute.xlu0 %1273
        %v1275 = vlaneseq
        %v1276 = vshrl.u32 %v1275, 7
        %v1277 = vsub.s32 0, %v1276
        %v1278 = vrot.slane %v794, %v1277
        %vm1279 = vcmp.eq.s32.totalorder %v1229, %v1278
        %vm1280 = vcmp.eq.s32.totalorder %v1232, %v1278
        %vm1281 = vcmp.eq.s32.totalorder %v1235, %v1278
        %vm1282 = vcmp.eq.s32.totalorder %v1238, %v1278
        %vm1283 = vcmp.eq.s32.totalorder %v1241, %v1278
        %vm1284 = vcmp.eq.s32.totalorder %v1244, %v1278
        %vm1285 = vcmp.eq.s32.totalorder %v1247, %v1278
        %vm1286 = vcmp.eq.s32.totalorder %v1250, %v1278
        %vm1287 = vcmp.eq.s32.totalorder %v1253, %v1278
        %vm1288 = vcmp.eq.s32.totalorder %v1256, %v1278
        %vm1289 = vcmp.eq.s32.totalorder %v1259, %v1278
        %vm1290 = vcmp.eq.s32.totalorder %v1262, %v1278
        %vm1291 = vcmp.eq.s32.totalorder %v1265, %v1278
        %vm1292 = vcmp.eq.s32.totalorder %v1268, %v1278
        %vm1293 = vcmp.eq.s32.totalorder %v1271, %v1278
        %vm1294 = vcmp.eq.s32.totalorder %v1274, %v1278
        %1296 = vset.pattern.permute.xlu0 0
        %1297 = vperm.xlu0 %1296, %v710
        %v1298 = vpop.permute.xlu0 %1297
        %1301 = vset.pattern.permute.xlu0 0
        %1302 = vperm.xlu0 %1301, %v711
        %v1303 = vpop.permute.xlu0 %1302
        %1306 = vset.pattern.permute.xlu0 0
        %1307 = vperm.xlu0 %1306, %v712
        %v1308 = vpop.permute.xlu0 %1307
        %1311 = vset.pattern.permute.xlu0 0
        %1312 = vperm.xlu0 %1311, %v713
        %v1313 = vpop.permute.xlu0 %1312
        %1316 = vset.pattern.permute.xlu0 0
        %1317 = vperm.xlu0 %1316, %v714
        %v1318 = vpop.permute.xlu0 %1317
        %1321 = vset.pattern.permute.xlu0 0
        %1322 = vperm.xlu0 %1321, %v715
        %v1323 = vpop.permute.xlu0 %1322
        %1326 = vset.pattern.permute.xlu0 0
        %1327 = vperm.xlu0 %1326, %v716
        %v1328 = vpop.permute.xlu0 %1327
        %1331 = vset.pattern.permute.xlu0 0
        %1332 = vperm.xlu0 %1331, %v717
        %v1333 = vpop.permute.xlu0 %1332
        %1336 = vset.pattern.permute.xlu0 0
        %1337 = vperm.xlu0 %1336, %v718
        %v1338 = vpop.permute.xlu0 %1337
        %1341 = vset.pattern.permute.xlu0 0
        %1342 = vperm.xlu0 %1341, %v719
        %v1343 = vpop.permute.xlu0 %1342
        %1346 = vset.pattern.permute.xlu0 0
        %1347 = vperm.xlu0 %1346, %v720
        %v1348 = vpop.permute.xlu0 %1347
        %1351 = vset.pattern.permute.xlu0 0
        %1352 = vperm.xlu0 %1351, %v721
        %v1353 = vpop.permute.xlu0 %1352
        %1356 = vset.pattern.permute.xlu0 0
        %1357 = vperm.xlu0 %1356, %v722
        %v1358 = vpop.permute.xlu0 %1357
        %1361 = vset.pattern.permute.xlu0 0
        %1362 = vperm.xlu0 %1361, %v723
        %v1363 = vpop.permute.xlu0 %1362
        %1366 = vset.pattern.permute.xlu0 0
        %1367 = vperm.xlu0 %1366, %v724
        %v1368 = vpop.permute.xlu0 %1367
        %1371 = vset.pattern.permute.xlu0 0
        %1372 = vperm.xlu0 %1371, %v725
        %v1373 = vpop.permute.xlu0 %1372
        %v1375 = vsel %vm1279, %v1298, 0.0
        %v1376 = vsel %vm1280, %v1303, 0.0
        %v1377 = vsel %vm1281, %v1308, 0.0
        %v1378 = vsel %vm1282, %v1313, 0.0
        %v1379 = vsel %vm1283, %v1318, 0.0
        %v1380 = vsel %vm1284, %v1323, 0.0
        %v1381 = vsel %vm1285, %v1328, 0.0
        %v1382 = vsel %vm1286, %v1333, 0.0
        %v1383 = vsel %vm1287, %v1338, 0.0
        %v1384 = vsel %vm1288, %v1343, 0.0
        %v1385 = vsel %vm1289, %v1348, 0.0
        %v1386 = vsel %vm1290, %v1353, 0.0
        %v1387 = vsel %vm1291, %v1358, 0.0
        %v1388 = vsel %vm1292, %v1363, 0.0
        %v1389 = vsel %vm1293, %v1368, 0.0
        %v1390 = vsel %vm1294, %v1373, 0.0
        %v1391 = vld [vmem:[#allocation2] sm:$0xff]
        %v1392 = vld [vmem:[#allocation2 + $0x8] sm:$0xff]
        %v1393 = vld [vmem:[#allocation2 + $0x10] sm:$0xff]
        %v1394 = vld [vmem:[#allocation2 + $0x18] sm:$0xff]
        %v1395 = vld [vmem:[#allocation2 + $0x20] sm:$0xff]
        %v1396 = vld [vmem:[#allocation2 + $0x28] sm:$0xff]
        %v1397 = vld [vmem:[#allocation2 + $0x30] sm:$0xff]
        %v1398 = vld [vmem:[#allocation2 + $0x38] sm:$0xff]
        %v1399 = vld [vmem:[#allocation2 + $0x40] sm:$0xff]
        %v1400 = vld [vmem:[#allocation2 + $0x48] sm:$0xff]
        %v1401 = vld [vmem:[#allocation2 + $0x50] sm:$0xff]
        %v1402 = vld [vmem:[#allocation2 + $0x58] sm:$0xff]
        %v1403 = vld [vmem:[#allocation2 + $0x60] sm:$0xff]
        %v1404 = vld [vmem:[#allocation2 + $0x68] sm:$0xff]
        %v1405 = vld [vmem:[#allocation2 + $0x70] sm:$0xff]
        %v1406 = vld [vmem:[#allocation2 + $0x78] sm:$0xff]
        %v1407 = vmul.f32 %v1211, %v1051
        %v1408 = vmul.f32 %v1212, %v1052
        %v1409 = vmul.f32 %v1213, %v1053
        %v1410 = vmul.f32 %v1214, %v1054
        %v1411 = vmul.f32 %v1215, %v1055
        %v1412 = vmul.f32 %v1216, %v1056
        %v1413 = vmul.f32 %v1217, %v1057
        %v1414 = vmul.f32 %v1218, %v1058
        %v1415 = vmul.f32 %v1219, %v1059
        %v1416 = vmul.f32 %v1220, %v1060
        %v1417 = vmul.f32 %v1221, %v1061
        %v1418 = vmul.f32 %v1222, %v1062
        %v1419 = vmul.f32 %v1223, %v1063
        %v1420 = vmul.f32 %v1224, %v1064
        %v1421 = vmul.f32 %v1225, %v1065
        %v1422 = vmul.f32 %v1226, %v1066
        %v1423 = vmul.f32 %v1375, %v1407
        %v1424 = vmul.f32 %v1376, %v1408
        %v1425 = vmul.f32 %v1377, %v1409
        %v1426 = vmul.f32 %v1378, %v1410
        %v1427 = vmul.f32 %v1379, %v1411
        %v1428 = vmul.f32 %v1380, %v1412
        %v1429 = vmul.f32 %v1381, %v1413
        %v1430 = vmul.f32 %v1382, %v1414
        %v1431 = vmul.f32 %v1383, %v1415
        %v1432 = vmul.f32 %v1384, %v1416
        %v1433 = vmul.f32 %v1385, %v1417
        %v1434 = vmul.f32 %v1386, %v1418
        %v1435 = vmul.f32 %v1387, %v1419
        %v1436 = vmul.f32 %v1388, %v1420
        %v1437 = vmul.f32 %v1389, %v1421
        %v1438 = vmul.f32 %v1390, %v1422
        %v1439 = vadd.f32 %v1391, %v1423
        %v1440 = vadd.f32 %v1392, %v1424
        %v1441 = vadd.f32 %v1393, %v1425
        %v1442 = vadd.f32 %v1394, %v1426
        %v1443 = vadd.f32 %v1395, %v1427
        %v1444 = vadd.f32 %v1396, %v1428
        %v1445 = vadd.f32 %v1397, %v1429
        %v1446 = vadd.f32 %v1398, %v1430
        %v1447 = vadd.f32 %v1399, %v1431
        %v1448 = vadd.f32 %v1400, %v1432
        %v1449 = vadd.f32 %v1401, %v1433
        %v1450 = vadd.f32 %v1402, %v1434
        %v1451 = vadd.f32 %v1403, %v1435
        %v1452 = vadd.f32 %v1404, %v1436
        %v1453 = vadd.f32 %v1405, %v1437
        %v1454 = vadd.f32 %v1406, %v1438
        %1455 = vst [vmem:[#allocation2] sm:$0xff] %v1439
        %1456 = vst [vmem:[#allocation2 + $0x8] sm:$0xff] %v1440
        %1457 = vst [vmem:[#allocation2 + $0x10] sm:$0xff] %v1441
        %1458 = vst [vmem:[#allocation2 + $0x18] sm:$0xff] %v1442
        %1459 = vst [vmem:[#allocation2 + $0x20] sm:$0xff] %v1443
        %1460 = vst [vmem:[#allocation2 + $0x28] sm:$0xff] %v1444
        %1461 = vst [vmem:[#allocation2 + $0x30] sm:$0xff] %v1445
        %1462 = vst [vmem:[#allocation2 + $0x38] sm:$0xff] %v1446
        %1463 = vst [vmem:[#allocation2 + $0x40] sm:$0xff] %v1447
        %1464 = vst [vmem:[#allocation2 + $0x48] sm:$0xff] %v1448
        %1465 = vst [vmem:[#allocation2 + $0x50] sm:$0xff] %v1449
        %1466 = vst [vmem:[#allocation2 + $0x58] sm:$0xff] %v1450
        %1467 = vst [vmem:[#allocation2 + $0x60] sm:$0xff] %v1451
        %1468 = vst [vmem:[#allocation2 + $0x68] sm:$0xff] %v1452
        %1469 = vst [vmem:[#allocation2 + $0x70] sm:$0xff] %v1453
        %1470 = vst [vmem:[#allocation2 + $0x78] sm:$0xff] %v1454
        %v1471 = vld [vmem:[%s560 + $0x4] sm:$0xf]
        %v1472 = vld [vmem:[%s560 + $0xc] sm:$0xf]
        %v1473 = vld [vmem:[%s560 + $0x14] sm:$0xf]
        %v1474 = vld [vmem:[%s560 + $0x1c] sm:$0xf]
        %v1475 = vld [vmem:[%s560 + $0x24] sm:$0xf]
        %v1476 = vld [vmem:[%s560 + $0x2c] sm:$0xf]
        %v1477 = vld [vmem:[%s560 + $0x34] sm:$0xf]
        %v1478 = vld [vmem:[%s560 + $0x3c] sm:$0xf]
        %v1479 = vld [vmem:[%s560 + $0x44] sm:$0xf]
        %v1480 = vld [vmem:[%s560 + $0x4c] sm:$0xf]
        %v1481 = vld [vmem:[%s560 + $0x54] sm:$0xf]
        %v1482 = vld [vmem:[%s560 + $0x5c] sm:$0xf]
        %v1483 = vld [vmem:[%s560 + $0x64] sm:$0xf]
        %v1484 = vld [vmem:[%s560 + $0x6c] sm:$0xf]
        %v1485 = vld [vmem:[%s560 + $0x74] sm:$0xf]
        %v1486 = vld [vmem:[%s560 + $0x7c] sm:$0xf]
        %v1487 = vunpack.c.l.bf16 %v1471
        %v1488 = vunpack.c.l.bf16 %v1472
        %v1489 = vunpack.c.l.bf16 %v1473
        %v1490 = vunpack.c.l.bf16 %v1474
        %v1491 = vunpack.c.l.bf16 %v1475
        %v1492 = vunpack.c.l.bf16 %v1476
        %v1493 = vunpack.c.l.bf16 %v1477
        %v1494 = vunpack.c.l.bf16 %v1478
        %v1495 = vunpack.c.l.bf16 %v1479
        %v1496 = vunpack.c.l.bf16 %v1480
        %v1497 = vunpack.c.l.bf16 %v1481
        %v1498 = vunpack.c.l.bf16 %v1482
        %v1499 = vunpack.c.l.bf16 %v1483
        %v1500 = vunpack.c.l.bf16 %v1484
        %v1501 = vunpack.c.l.bf16 %v1485
        %v1502 = vunpack.c.l.bf16 %v1486
        %v1503 = vld [vmem:[%s600 + $0x8] sm:$0xff]
        %v1504 = vld [vmem:[%s600 + $0x18] sm:$0xff]
        %v1505 = vld [vmem:[%s600 + $0x28] sm:$0xff]
        %v1506 = vld [vmem:[%s600 + $0x38] sm:$0xff]
        %v1507 = vunpack.c.0.s8 %v1503
        %v1508 = vunpack.c.1.s8 %v1503
        %v1509 = vunpack.c.2.s8 %v1503
        %v1510 = vunpack.c.3.s8 %v1503
        %v1511 = vunpack.c.0.s8 %v1504
        %v1512 = vunpack.c.1.s8 %v1504
        %v1513 = vunpack.c.2.s8 %v1504
        %v1514 = vunpack.c.3.s8 %v1504
        %v1515 = vunpack.c.0.s8 %v1505
        %v1516 = vunpack.c.1.s8 %v1505
        %v1517 = vunpack.c.2.s8 %v1505
        %v1518 = vunpack.c.3.s8 %v1505
        %v1519 = vunpack.c.0.s8 %v1506
        %v1520 = vunpack.c.1.s8 %v1506
        %v1521 = vunpack.c.2.s8 %v1506
        %v1522 = vunpack.c.3.s8 %v1506
        %v1523 = vcvt.s32.f32 %v1507
        %v1524 = vcvt.s32.f32 %v1508
        %v1525 = vcvt.s32.f32 %v1509
        %v1526 = vcvt.s32.f32 %v1510
        %v1527 = vcvt.s32.f32 %v1511
        %v1528 = vcvt.s32.f32 %v1512
        %v1529 = vcvt.s32.f32 %v1513
        %v1530 = vcvt.s32.f32 %v1514
        %v1531 = vcvt.s32.f32 %v1515
        %v1532 = vcvt.s32.f32 %v1516
        %v1533 = vcvt.s32.f32 %v1517
        %v1534 = vcvt.s32.f32 %v1518
        %v1535 = vcvt.s32.f32 %v1519
        %v1536 = vcvt.s32.f32 %v1520
        %v1537 = vcvt.s32.f32 %v1521
        %v1538 = vcvt.s32.f32 %v1522
        %v1539 = vld [vmem:[%s640 + $0x1] sm:$0x1]
        %v1540 = vand.u32 2147483647, %v1487
        %v1541 = vand.u32 2147483647, %v1488
        %v1542 = vand.u32 2147483647, %v1489
        %v1543 = vand.u32 2147483647, %v1490
        %v1544 = vand.u32 2147483647, %v1491
        %v1545 = vand.u32 2147483647, %v1492
        %v1546 = vand.u32 2147483647, %v1493
        %v1547 = vand.u32 2147483647, %v1494
        %v1548 = vand.u32 2147483647, %v1495
        %v1549 = vand.u32 2147483647, %v1496
        %v1550 = vand.u32 2147483647, %v1497
        %v1551 = vand.u32 2147483647, %v1498
        %v1552 = vand.u32 2147483647, %v1499
        %v1553 = vand.u32 2147483647, %v1500
        %v1554 = vand.u32 2147483647, %v1501
        %v1555 = vand.u32 2147483647, %v1502
        %v1556 = vsub.f32 0.0, %v1540
        %v1557 = vsub.f32 0.0, %v1541
        %v1558 = vsub.f32 0.0, %v1542
        %v1559 = vsub.f32 0.0, %v1543
        %v1560 = vsub.f32 0.0, %v1544
        %v1561 = vsub.f32 0.0, %v1545
        %v1562 = vsub.f32 0.0, %v1546
        %v1563 = vsub.f32 0.0, %v1547
        %v1564 = vsub.f32 0.0, %v1548
        %v1565 = vsub.f32 0.0, %v1549
        %v1566 = vsub.f32 0.0, %v1550
        %v1567 = vsub.f32 0.0, %v1551
        %v1568 = vsub.f32 0.0, %v1552
        %v1569 = vsub.f32 0.0, %v1553
        %v1570 = vsub.f32 0.0, %v1554
        %v1571 = vsub.f32 0.0, %v1555
        %v1572 = vmul.f32 %v1556, 1.442695
        %v1573 = vpow.pop %v1572
        %v1574 = vmul.f32 %v1557, 1.442695
        %v1575 = vpow.pop %v1574
        %v1576 = vmul.f32 %v1558, 1.442695
        %v1577 = vpow.pop %v1576
        %v1578 = vmul.f32 %v1559, 1.442695
        %v1579 = vpow.pop %v1578
        %v1580 = vmul.f32 %v1560, 1.442695
        %v1581 = vpow.pop %v1580
        %v1582 = vmul.f32 %v1561, 1.442695
        %v1583 = vpow.pop %v1582
        %v1584 = vmul.f32 %v1562, 1.442695
        %v1585 = vpow.pop %v1584
        %v1586 = vmul.f32 %v1563, 1.442695
        %v1587 = vpow.pop %v1586
        %v1588 = vmul.f32 %v1564, 1.442695
        %v1589 = vpow.pop %v1588
        %v1590 = vmul.f32 %v1565, 1.442695
        %v1591 = vpow.pop %v1590
        %v1592 = vmul.f32 %v1566, 1.442695
        %v1593 = vpow.pop %v1592
        %v1594 = vmul.f32 %v1567, 1.442695
        %v1595 = vpow.pop %v1594
        %v1596 = vmul.f32 %v1568, 1.442695
        %v1597 = vpow.pop %v1596
        %v1598 = vmul.f32 %v1569, 1.442695
        %v1599 = vpow.pop %v1598
        %v1600 = vmul.f32 %v1570, 1.442695
        %v1601 = vpow.pop %v1600
        %v1602 = vmul.f32 %v1571, 1.442695
        %v1603 = vpow.pop %v1602
        %v1604 = vmax.f32 %v1487, 0.0
        %v1605 = vmax.f32 %v1488, 0.0
        %v1606 = vmax.f32 %v1489, 0.0
        %v1607 = vmax.f32 %v1490, 0.0
        %v1608 = vmax.f32 %v1491, 0.0
        %v1609 = vmax.f32 %v1492, 0.0
        %v1610 = vmax.f32 %v1493, 0.0
        %v1611 = vmax.f32 %v1494, 0.0
        %v1612 = vmax.f32 %v1495, 0.0
        %v1613 = vmax.f32 %v1496, 0.0
        %v1614 = vmax.f32 %v1497, 0.0
        %v1615 = vmax.f32 %v1498, 0.0
        %v1616 = vmax.f32 %v1499, 0.0
        %v1617 = vmax.f32 %v1500, 0.0
        %v1618 = vmax.f32 %v1501, 0.0
        %v1619 = vmax.f32 %v1502, 0.0
        %v1620 = vmul.f32 %v1487, %v1523
        %v1621 = vmul.f32 %v1488, %v1524
        %v1622 = vmul.f32 %v1489, %v1525
        %v1623 = vmul.f32 %v1490, %v1526
        %v1624 = vmul.f32 %v1491, %v1527
        %v1625 = vmul.f32 %v1492, %v1528
        %v1626 = vmul.f32 %v1493, %v1529
        %v1627 = vmul.f32 %v1494, %v1530
        %v1628 = vmul.f32 %v1495, %v1531
        %v1629 = vmul.f32 %v1496, %v1532
        %v1630 = vmul.f32 %v1497, %v1533
        %v1631 = vmul.f32 %v1498, %v1534
        %v1632 = vmul.f32 %v1499, %v1535
        %v1633 = vmul.f32 %v1500, %v1536
        %v1634 = vmul.f32 %v1501, %v1537
        %v1635 = vmul.f32 %v1502, %v1538
        %v1636 = vsub.f32 %v1604, %v1620
        %v1637 = vsub.f32 %v1605, %v1621
        %v1638 = vsub.f32 %v1606, %v1622
        %v1639 = vsub.f32 %v1607, %v1623
        %v1640 = vsub.f32 %v1608, %v1624
        %v1641 = vsub.f32 %v1609, %v1625
        %v1642 = vsub.f32 %v1610, %v1626
        %v1643 = vsub.f32 %v1611, %v1627
        %v1644 = vsub.f32 %v1612, %v1628
        %v1645 = vsub.f32 %v1613, %v1629
        %v1646 = vsub.f32 %v1614, %v1630
        %v1647 = vsub.f32 %v1615, %v1631
        %v1648 = vsub.f32 %v1616, %v1632
        %v1649 = vsub.f32 %v1617, %v1633
        %v1650 = vsub.f32 %v1618, %v1634
        %v1651 = vsub.f32 %v1619, %v1635
        %v1652 = vadd.f32 %v1573, 1.0
        %v1653 = vlog2.pop %v1652
        %v1654 = vmul.f32 %v1653, 0.6931472
        %v1655 = vmul.f32 -0.5, %v1573
        %v1656 = vadd.f32 %v1655, 1.0
        %v1657 = vmul.f32 %v1656, %v1573
        %v1658 = vand.u32 2147483647, %v1573
        %vm1659 = vcmp.lt.f32.partialorder %v1658, 0.0004427343
        %v1660 = vsel %vm1659, %v1657, %v1654
        %v1661 = vadd.f32 %v1575, 1.0
        %v1662 = vlog2.pop %v1661
        %v1663 = vmul.f32 %v1662, 0.6931472
        %v1664 = vmul.f32 -0.5, %v1575
        %v1665 = vadd.f32 %v1664, 1.0
        %v1666 = vmul.f32 %v1665, %v1575
        %v1667 = vand.u32 2147483647, %v1575
        %vm1668 = vcmp.lt.f32.partialorder %v1667, 0.0004427343
        %v1669 = vsel %vm1668, %v1666, %v1663
        %v1670 = vadd.f32 %v1577, 1.0
        %v1671 = vlog2.pop %v1670
        %v1672 = vmul.f32 %v1671, 0.6931472
        %v1673 = vmul.f32 -0.5, %v1577
        %v1674 = vadd.f32 %v1673, 1.0
        %v1675 = vmul.f32 %v1674, %v1577
        %v1676 = vand.u32 2147483647, %v1577
        %vm1677 = vcmp.lt.f32.partialorder %v1676, 0.0004427343
        %v1678 = vsel %vm1677, %v1675, %v1672
        %v1679 = vadd.f32 %v1579, 1.0
        %v1680 = vlog2.pop %v1679
        %v1681 = vmul.f32 %v1680, 0.6931472
        %v1682 = vmul.f32 -0.5, %v1579
        %v1683 = vadd.f32 %v1682, 1.0
        %v1684 = vmul.f32 %v1683, %v1579
        %v1685 = vand.u32 2147483647, %v1579
        %vm1686 = vcmp.lt.f32.partialorder %v1685, 0.0004427343
        %v1687 = vsel %vm1686, %v1684, %v1681
        %v1688 = vadd.f32 %v1581, 1.0
        %v1689 = vlog2.pop %v1688
        %v1690 = vmul.f32 %v1689, 0.6931472
        %v1691 = vmul.f32 -0.5, %v1581
        %v1692 = vadd.f32 %v1691, 1.0
        %v1693 = vmul.f32 %v1692, %v1581
        %v1694 = vand.u32 2147483647, %v1581
        %vm1695 = vcmp.lt.f32.partialorder %v1694, 0.0004427343
        %v1696 = vsel %vm1695, %v1693, %v1690
        %v1697 = vadd.f32 %v1583, 1.0
        %v1698 = vlog2.pop %v1697
        %v1699 = vmul.f32 %v1698, 0.6931472
        %v1700 = vmul.f32 -0.5, %v1583
        %v1701 = vadd.f32 %v1700, 1.0
        %v1702 = vmul.f32 %v1701, %v1583
        %v1703 = vand.u32 2147483647, %v1583
        %vm1704 = vcmp.lt.f32.partialorder %v1703, 0.0004427343
        %v1705 = vsel %vm1704, %v1702, %v1699
        %v1706 = vadd.f32 %v1585, 1.0
        %v1707 = vlog2.pop %v1706
        %v1708 = vmul.f32 %v1707, 0.6931472
        %v1709 = vmul.f32 -0.5, %v1585
        %v1710 = vadd.f32 %v1709, 1.0
        %v1711 = vmul.f32 %v1710, %v1585
        %v1712 = vand.u32 2147483647, %v1585
        %vm1713 = vcmp.lt.f32.partialorder %v1712, 0.0004427343
        %v1714 = vsel %vm1713, %v1711, %v1708
        %v1715 = vadd.f32 %v1587, 1.0
        %v1716 = vlog2.pop %v1715
        %v1717 = vmul.f32 %v1716, 0.6931472
        %v1718 = vmul.f32 -0.5, %v1587
        %v1719 = vadd.f32 %v1718, 1.0
        %v1720 = vmul.f32 %v1719, %v1587
        %v1721 = vand.u32 2147483647, %v1587
        %vm1722 = vcmp.lt.f32.partialorder %v1721, 0.0004427343
        %v1723 = vsel %vm1722, %v1720, %v1717
        %v1724 = vadd.f32 %v1589, 1.0
        %v1725 = vlog2.pop %v1724
        %v1726 = vmul.f32 %v1725, 0.6931472
        %v1727 = vmul.f32 -0.5, %v1589
        %v1728 = vadd.f32 %v1727, 1.0
        %v1729 = vmul.f32 %v1728, %v1589
        %v1730 = vand.u32 2147483647, %v1589
        %vm1731 = vcmp.lt.f32.partialorder %v1730, 0.0004427343
        %v1732 = vsel %vm1731, %v1729, %v1726
        %v1733 = vadd.f32 %v1591, 1.0
        %v1734 = vlog2.pop %v1733
        %v1735 = vmul.f32 %v1734, 0.6931472
        %v1736 = vmul.f32 -0.5, %v1591
        %v1737 = vadd.f32 %v1736, 1.0
        %v1738 = vmul.f32 %v1737, %v1591
        %v1739 = vand.u32 2147483647, %v1591
        %vm1740 = vcmp.lt.f32.partialorder %v1739, 0.0004427343
        %v1741 = vsel %vm1740, %v1738, %v1735
        %v1742 = vadd.f32 %v1593, 1.0
        %v1743 = vlog2.pop %v1742
        %v1744 = vmul.f32 %v1743, 0.6931472
        %v1745 = vmul.f32 -0.5, %v1593
        %v1746 = vadd.f32 %v1745, 1.0
        %v1747 = vmul.f32 %v1746, %v1593
        %v1748 = vand.u32 2147483647, %v1593
        %vm1749 = vcmp.lt.f32.partialorder %v1748, 0.0004427343
        %v1750 = vsel %vm1749, %v1747, %v1744
        %v1751 = vadd.f32 %v1595, 1.0
        %v1752 = vlog2.pop %v1751
        %v1753 = vmul.f32 %v1752, 0.6931472
        %v1754 = vmul.f32 -0.5, %v1595
        %v1755 = vadd.f32 %v1754, 1.0
        %v1756 = vmul.f32 %v1755, %v1595
        %v1757 = vand.u32 2147483647, %v1595
        %vm1758 = vcmp.lt.f32.partialorder %v1757, 0.0004427343
        %v1759 = vsel %vm1758, %v1756, %v1753
        %v1760 = vadd.f32 %v1597, 1.0
        %v1761 = vlog2.pop %v1760
        %v1762 = vmul.f32 %v1761, 0.6931472
        %v1763 = vmul.f32 -0.5, %v1597
        %v1764 = vadd.f32 %v1763, 1.0
        %v1765 = vmul.f32 %v1764, %v1597
        %v1766 = vand.u32 2147483647, %v1597
        %vm1767 = vcmp.lt.f32.partialorder %v1766, 0.0004427343
        %v1768 = vsel %vm1767, %v1765, %v1762
        %v1769 = vadd.f32 %v1599, 1.0
        %v1770 = vlog2.pop %v1769
        %v1771 = vmul.f32 %v1770, 0.6931472
        %v1772 = vmul.f32 -0.5, %v1599
        %v1773 = vadd.f32 %v1772, 1.0
        %v1774 = vmul.f32 %v1773, %v1599
        %v1775 = vand.u32 2147483647, %v1599
        %vm1776 = vcmp.lt.f32.partialorder %v1775, 0.0004427343
        %v1777 = vsel %vm1776, %v1774, %v1771
        %v1778 = vadd.f32 %v1601, 1.0
        %v1779 = vlog2.pop %v1778
        %v1780 = vmul.f32 %v1779, 0.6931472
        %v1781 = vmul.f32 -0.5, %v1601
        %v1782 = vadd.f32 %v1781, 1.0
        %v1783 = vmul.f32 %v1782, %v1601
        %v1784 = vand.u32 2147483647, %v1601
        %vm1785 = vcmp.lt.f32.partialorder %v1784, 0.0004427343
        %v1786 = vsel %vm1785, %v1783, %v1780
        %v1787 = vadd.f32 %v1603, 1.0
        %v1788 = vlog2.pop %v1787
        %v1789 = vmul.f32 %v1788, 0.6931472
        %v1790 = vmul.f32 -0.5, %v1603
        %v1791 = vadd.f32 %v1790, 1.0
        %v1792 = vmul.f32 %v1791, %v1603
        %v1793 = vand.u32 2147483647, %v1603
        %vm1794 = vcmp.lt.f32.partialorder %v1793, 0.0004427343
        %v1795 = vsel %vm1794, %v1792, %v1789
        %v1796 = vadd.f32 %v1636, %v1660
        %v1797 = vadd.f32 %v1637, %v1669
        %v1798 = vadd.f32 %v1638, %v1678
        %v1799 = vadd.f32 %v1639, %v1687
        %v1800 = vadd.f32 %v1640, %v1696
        %v1801 = vadd.f32 %v1641, %v1705
        %v1802 = vadd.f32 %v1642, %v1714
        %v1803 = vadd.f32 %v1643, %v1723
        %v1804 = vadd.f32 %v1644, %v1732
        %v1805 = vadd.f32 %v1645, %v1741
        %v1806 = vadd.f32 %v1646, %v1750
        %v1807 = vadd.f32 %v1647, %v1759
        %v1808 = vadd.f32 %v1648, %v1768
        %v1809 = vadd.f32 %v1649, %v1777
        %v1810 = vadd.f32 %v1650, %v1786
        %v1811 = vadd.f32 %v1651, %v1795
        %v1812 = vadd.f32 %v1573, 1.0
        %v1813 = vadd.f32 %v1575, 1.0
        %v1814 = vadd.f32 %v1577, 1.0
        %v1815 = vadd.f32 %v1579, 1.0
        %v1816 = vadd.f32 %v1581, 1.0
        %v1817 = vadd.f32 %v1583, 1.0
        %v1818 = vadd.f32 %v1585, 1.0
        %v1819 = vadd.f32 %v1587, 1.0
        %v1820 = vadd.f32 %v1589, 1.0
        %v1821 = vadd.f32 %v1591, 1.0
        %v1822 = vadd.f32 %v1593, 1.0
        %v1823 = vadd.f32 %v1595, 1.0
        %v1824 = vadd.f32 %v1597, 1.0
        %v1825 = vadd.f32 %v1599, 1.0
        %v1826 = vadd.f32 %v1601, 1.0
        %v1827 = vadd.f32 %v1603, 1.0
        %vm1828 = vcmp.ge.f32.partialorder %v1487, 0.0
        %vm1829 = vcmp.ge.f32.partialorder %v1488, 0.0
        %vm1830 = vcmp.ge.f32.partialorder %v1489, 0.0
        %vm1831 = vcmp.ge.f32.partialorder %v1490, 0.0
        %vm1832 = vcmp.ge.f32.partialorder %v1491, 0.0
        %vm1833 = vcmp.ge.f32.partialorder %v1492, 0.0
        %vm1834 = vcmp.ge.f32.partialorder %v1493, 0.0
        %vm1835 = vcmp.ge.f32.partialorder %v1494, 0.0
        %vm1836 = vcmp.ge.f32.partialorder %v1495, 0.0
        %vm1837 = vcmp.ge.f32.partialorder %v1496, 0.0
        %vm1838 = vcmp.ge.f32.partialorder %v1497, 0.0
        %vm1839 = vcmp.ge.f32.partialorder %v1498, 0.0
        %vm1840 = vcmp.ge.f32.partialorder %v1499, 0.0
        %vm1841 = vcmp.ge.f32.partialorder %v1500, 0.0
        %vm1842 = vcmp.ge.f32.partialorder %v1501, 0.0
        %vm1843 = vcmp.ge.f32.partialorder %v1502, 0.0
        %v1844 = vsel %vm1828, 1.0, %v1573
        %v1845 = vsel %vm1829, 1.0, %v1575
        %v1846 = vsel %vm1830, 1.0, %v1577
        %v1847 = vsel %vm1831, 1.0, %v1579
        %v1848 = vsel %vm1832, 1.0, %v1581
        %v1849 = vsel %vm1833, 1.0, %v1583
        %v1850 = vsel %vm1834, 1.0, %v1585
        %v1851 = vsel %vm1835, 1.0, %v1587
        %v1852 = vsel %vm1836, 1.0, %v1589
        %v1853 = vsel %vm1837, 1.0, %v1591
        %v1854 = vsel %vm1838, 1.0, %v1593
        %v1855 = vsel %vm1839, 1.0, %v1595
        %v1856 = vsel %vm1840, 1.0, %v1597
        %v1857 = vsel %vm1841, 1.0, %v1599
        %v1858 = vsel %vm1842, 1.0, %v1601
        %v1859 = vsel %vm1843, 1.0, %v1603
        %vm1860 = vcmp.gt.f32.partialorder %v1523, 0.5
        %vm1861 = vcmp.gt.f32.partialorder %v1524, 0.5
        %vm1862 = vcmp.gt.f32.partialorder %v1525, 0.5
        %vm1863 = vcmp.gt.f32.partialorder %v1526, 0.5
        %vm1864 = vcmp.gt.f32.partialorder %v1527, 0.5
        %vm1865 = vcmp.gt.f32.partialorder %v1528, 0.5
        %vm1866 = vcmp.gt.f32.partialorder %v1529, 0.5
        %vm1867 = vcmp.gt.f32.partialorder %v1530, 0.5
        %vm1868 = vcmp.gt.f32.partialorder %v1531, 0.5
        %vm1869 = vcmp.gt.f32.partialorder %v1532, 0.5
        %vm1870 = vcmp.gt.f32.partialorder %v1533, 0.5
        %vm1871 = vcmp.gt.f32.partialorder %v1534, 0.5
        %vm1872 = vcmp.gt.f32.partialorder %v1535, 0.5
        %vm1873 = vcmp.gt.f32.partialorder %v1536, 0.5
        %vm1874 = vcmp.gt.f32.partialorder %v1537, 0.5
        %vm1875 = vcmp.gt.f32.partialorder %v1538, 0.5
        %v1876 = vsub.f32 %v1812, %v1844
        %v1877 = vsub.f32 %v1813, %v1845
        %v1878 = vsub.f32 %v1814, %v1846
        %v1879 = vsub.f32 %v1815, %v1847
        %v1880 = vsub.f32 %v1816, %v1848
        %v1881 = vsub.f32 %v1817, %v1849
        %v1882 = vsub.f32 %v1818, %v1850
        %v1883 = vsub.f32 %v1819, %v1851
        %v1884 = vsub.f32 %v1820, %v1852
        %v1885 = vsub.f32 %v1821, %v1853
        %v1886 = vsub.f32 %v1822, %v1854
        %v1887 = vsub.f32 %v1823, %v1855
        %v1888 = vsub.f32 %v1824, %v1856
        %v1889 = vsub.f32 %v1825, %v1857
        %v1890 = vsub.f32 %v1826, %v1858
        %v1891 = vsub.f32 %v1827, %v1859
        %v1892 = vsel %vm1860, %v1844, %v1876
        %v1893 = vsel %vm1861, %v1845, %v1877
        %v1894 = vsel %vm1862, %v1846, %v1878
        %v1895 = vsel %vm1863, %v1847, %v1879
        %v1896 = vsel %vm1864, %v1848, %v1880
        %v1897 = vsel %vm1865, %v1849, %v1881
        %v1898 = vsel %vm1866, %v1850, %v1882
        %v1899 = vsel %vm1867, %v1851, %v1883
        %v1900 = vsel %vm1868, %v1852, %v1884
        %v1901 = vsel %vm1869, %v1853, %v1885
        %v1902 = vsel %vm1870, %v1854, %v1886
        %v1903 = vsel %vm1871, %v1855, %v1887
        %v1904 = vsel %vm1872, %v1856, %v1888
        %v1905 = vsel %vm1873, %v1857, %v1889
        %v1906 = vsel %vm1874, %v1858, %v1890
        %v1907 = vsel %vm1875, %v1859, %v1891
        %v1908 = vrcp.pop %v1812
        %v1909 = vrcp.pop %v1813
        %v1910 = vrcp.pop %v1814
        %v1911 = vrcp.pop %v1815
        %v1912 = vrcp.pop %v1816
        %v1913 = vrcp.pop %v1817
        %v1914 = vrcp.pop %v1818
        %v1915 = vrcp.pop %v1819
        %v1916 = vrcp.pop %v1820
        %v1917 = vrcp.pop %v1821
        %v1918 = vrcp.pop %v1822
        %v1919 = vrcp.pop %v1823
        %v1920 = vrcp.pop %v1824
        %v1921 = vrcp.pop %v1825
        %v1922 = vrcp.pop %v1826
        %v1923 = vrcp.pop %v1827
        %v1924 = vmul.f32 %v1892, %v1908
        %v1925 = vmul.f32 %v1893, %v1909
        %v1926 = vmul.f32 %v1894, %v1910
        %v1927 = vmul.f32 %v1895, %v1911
        %v1928 = vmul.f32 %v1896, %v1912
        %v1929 = vmul.f32 %v1897, %v1913
        %v1930 = vmul.f32 %v1898, %v1914
        %v1931 = vmul.f32 %v1899, %v1915
        %v1932 = vmul.f32 %v1900, %v1916
        %v1933 = vmul.f32 %v1901, %v1917
        %v1934 = vmul.f32 %v1902, %v1918
        %v1935 = vmul.f32 %v1903, %v1919
        %v1936 = vmul.f32 %v1904, %v1920
        %v1937 = vmul.f32 %v1905, %v1921
        %v1938 = vmul.f32 %v1906, %v1922
        %v1939 = vmul.f32 %v1907, %v1923
        %v1940 = vsub.f32 1.0, %v1924
        %v1941 = vsub.f32 1.0, %v1925
        %v1942 = vsub.f32 1.0, %v1926
        %v1943 = vsub.f32 1.0, %v1927
        %v1944 = vsub.f32 1.0, %v1928
        %v1945 = vsub.f32 1.0, %v1929
        %v1946 = vsub.f32 1.0, %v1930
        %v1947 = vsub.f32 1.0, %v1931
        %v1948 = vsub.f32 1.0, %v1932
        %v1949 = vsub.f32 1.0, %v1933
        %v1950 = vsub.f32 1.0, %v1934
        %v1951 = vsub.f32 1.0, %v1935
        %v1952 = vsub.f32 1.0, %v1936
        %v1953 = vsub.f32 1.0, %v1937
        %v1954 = vsub.f32 1.0, %v1938
        %v1955 = vsub.f32 1.0, %v1939
        %v1956 = vmul.f32 %v1940, %v1940
        %v1957 = vmul.f32 %v1941, %v1941
        %v1958 = vmul.f32 %v1942, %v1942
        %v1959 = vmul.f32 %v1943, %v1943
        %v1960 = vmul.f32 %v1944, %v1944
        %v1961 = vmul.f32 %v1945, %v1945
        %v1962 = vmul.f32 %v1946, %v1946
        %v1963 = vmul.f32 %v1947, %v1947
        %v1964 = vmul.f32 %v1948, %v1948
        %v1965 = vmul.f32 %v1949, %v1949
        %v1966 = vmul.f32 %v1950, %v1950
        %v1967 = vmul.f32 %v1951, %v1951
        %v1968 = vmul.f32 %v1952, %v1952
        %v1969 = vmul.f32 %v1953, %v1953
        %v1970 = vmul.f32 %v1954, %v1954
        %v1971 = vmul.f32 %v1955, %v1955
        %v1972 = vlaneseq
        %v1973 = vshrl.u32 %v1972, 7
        %v1974 = vsub.s32 0, %v1973
        %v1975 = vrot.slane %v1539, %v1974
        %vm1976 = vcmp.eq.s32.totalorder %v1229, %v1975
        %vm1977 = vcmp.eq.s32.totalorder %v1232, %v1975
        %vm1978 = vcmp.eq.s32.totalorder %v1235, %v1975
        %vm1979 = vcmp.eq.s32.totalorder %v1238, %v1975
        %vm1980 = vcmp.eq.s32.totalorder %v1241, %v1975
        %vm1981 = vcmp.eq.s32.totalorder %v1244, %v1975
        %vm1982 = vcmp.eq.s32.totalorder %v1247, %v1975
        %vm1983 = vcmp.eq.s32.totalorder %v1250, %v1975
        %vm1984 = vcmp.eq.s32.totalorder %v1253, %v1975
        %vm1985 = vcmp.eq.s32.totalorder %v1256, %v1975
        %vm1986 = vcmp.eq.s32.totalorder %v1259, %v1975
        %vm1987 = vcmp.eq.s32.totalorder %v1262, %v1975
        %vm1988 = vcmp.eq.s32.totalorder %v1265, %v1975
        %vm1989 = vcmp.eq.s32.totalorder %v1268, %v1975
        %vm1990 = vcmp.eq.s32.totalorder %v1271, %v1975
        %vm1991 = vcmp.eq.s32.totalorder %v1274, %v1975
        %v1992 = vsel %vm1976, %v1298, 0.0
        %v1993 = vsel %vm1977, %v1303, 0.0
        %v1994 = vsel %vm1978, %v1308, 0.0
        %v1995 = vsel %vm1979, %v1313, 0.0
        %v1996 = vsel %vm1980, %v1318, 0.0
        %v1997 = vsel %vm1981, %v1323, 0.0
        %v1998 = vsel %vm1982, %v1328, 0.0
        %v1999 = vsel %vm1983, %v1333, 0.0
        %v2000 = vsel %vm1984, %v1338, 0.0
        %v2001 = vsel %vm1985, %v1343, 0.0
        %v2002 = vsel %vm1986, %v1348, 0.0
        %v2003 = vsel %vm1987, %v1353, 0.0
        %v2004 = vsel %vm1988, %v1358, 0.0
        %v2005 = vsel %vm1989, %v1363, 0.0
        %v2006 = vsel %vm1990, %v1368, 0.0
        %v2007 = vsel %vm1991, %v1373, 0.0
        %v2008 = vld [vmem:[#allocation2] sm:$0xff]
        %v2009 = vld [vmem:[#allocation2 + $0x8] sm:$0xff]
        %v2010 = vld [vmem:[#allocation2 + $0x10] sm:$0xff]
        %v2011 = vld [vmem:[#allocation2 + $0x18] sm:$0xff]
        %v2012 = vld [vmem:[#allocation2 + $0x20] sm:$0xff]
        %v2013 = vld [vmem:[#allocation2 + $0x28] sm:$0xff]
        %v2014 = vld [vmem:[#allocation2 + $0x30] sm:$0xff]
        %v2015 = vld [vmem:[#allocation2 + $0x38] sm:$0xff]
        %v2016 = vld [vmem:[#allocation2 + $0x40] sm:$0xff]
        %v2017 = vld [vmem:[#allocation2 + $0x48] sm:$0xff]
        %v2018 = vld [vmem:[#allocation2 + $0x50] sm:$0xff]
        %v2019 = vld [vmem:[#allocation2 + $0x58] sm:$0xff]
        %v2020 = vld [vmem:[#allocation2 + $0x60] sm:$0xff]
        %v2021 = vld [vmem:[#allocation2 + $0x68] sm:$0xff]
        %v2022 = vld [vmem:[#allocation2 + $0x70] sm:$0xff]
        %v2023 = vld [vmem:[#allocation2 + $0x78] sm:$0xff]
        %v2024 = vmul.f32 %v1956, %v1796
        %v2025 = vmul.f32 %v1957, %v1797
        %v2026 = vmul.f32 %v1958, %v1798
        %v2027 = vmul.f32 %v1959, %v1799
        %v2028 = vmul.f32 %v1960, %v1800
        %v2029 = vmul.f32 %v1961, %v1801
        %v2030 = vmul.f32 %v1962, %v1802
        %v2031 = vmul.f32 %v1963, %v1803
        %v2032 = vmul.f32 %v1964, %v1804
        %v2033 = vmul.f32 %v1965, %v1805
        %v2034 = vmul.f32 %v1966, %v1806
        %v2035 = vmul.f32 %v1967, %v1807
        %v2036 = vmul.f32 %v1968, %v1808
        %v2037 = vmul.f32 %v1969, %v1809
        %v2038 = vmul.f32 %v1970, %v1810
        %v2039 = vmul.f32 %v1971, %v1811
        %v2040 = vmul.f32 %v1992, %v2024
        %v2041 = vmul.f32 %v1993, %v2025
        %v2042 = vmul.f32 %v1994, %v2026
        %v2043 = vmul.f32 %v1995, %v2027
        %v2044 = vmul.f32 %v1996, %v2028
        %v2045 = vmul.f32 %v1997, %v2029
        %v2046 = vmul.f32 %v1998, %v2030
        %v2047 = vmul.f32 %v1999, %v2031
        %v2048 = vmul.f32 %v2000, %v2032
        %v2049 = vmul.f32 %v2001, %v2033
        %v2050 = vmul.f32 %v2002, %v2034
        %v2051 = vmul.f32 %v2003, %v2035
        %v2052 = vmul.f32 %v2004, %v2036
        %v2053 = vmul.f32 %v2005, %v2037
        %v2054 = vmul.f32 %v2006, %v2038
        %v2055 = vmul.f32 %v2007, %v2039
        %v2056 = vadd.f32 %v2008, %v2040
        %v2057 = vadd.f32 %v2009, %v2041
        %v2058 = vadd.f32 %v2010, %v2042
        %v2059 = vadd.f32 %v2011, %v2043
        %v2060 = vadd.f32 %v2012, %v2044
        %v2061 = vadd.f32 %v2013, %v2045
        %v2062 = vadd.f32 %v2014, %v2046
        %v2063 = vadd.f32 %v2015, %v2047
        %v2064 = vadd.f32 %v2016, %v2048
        %v2065 = vadd.f32 %v2017, %v2049
        %v2066 = vadd.f32 %v2018, %v2050
        %v2067 = vadd.f32 %v2019, %v2051
        %v2068 = vadd.f32 %v2020, %v2052
        %v2069 = vadd.f32 %v2021, %v2053
        %v2070 = vadd.f32 %v2022, %v2054
        %v2071 = vadd.f32 %v2023, %v2055
        %2072 = vst [vmem:[#allocation2] sm:$0xff] %v2056
        %2073 = vst [vmem:[#allocation2 + $0x8] sm:$0xff] %v2057
        %2074 = vst [vmem:[#allocation2 + $0x10] sm:$0xff] %v2058
        %2075 = vst [vmem:[#allocation2 + $0x18] sm:$0xff] %v2059
        %2076 = vst [vmem:[#allocation2 + $0x20] sm:$0xff] %v2060
        %2077 = vst [vmem:[#allocation2 + $0x28] sm:$0xff] %v2061
        %2078 = vst [vmem:[#allocation2 + $0x30] sm:$0xff] %v2062
        %2079 = vst [vmem:[#allocation2 + $0x38] sm:$0xff] %v2063
        %2080 = vst [vmem:[#allocation2 + $0x40] sm:$0xff] %v2064
        %2081 = vst [vmem:[#allocation2 + $0x48] sm:$0xff] %v2065
        %2082 = vst [vmem:[#allocation2 + $0x50] sm:$0xff] %v2066
        %2083 = vst [vmem:[#allocation2 + $0x58] sm:$0xff] %v2067
        %2084 = vst [vmem:[#allocation2 + $0x60] sm:$0xff] %v2068
        %2085 = vst [vmem:[#allocation2 + $0x68] sm:$0xff] %v2069
        %2086 = vst [vmem:[#allocation2 + $0x70] sm:$0xff] %v2070
        %2087 = vst [vmem:[#allocation2 + $0x78] sm:$0xff] %v2071
      $region48: #{segment_loss.1} parent=39 // pred_fallthru
        _
      // Predicated region
      $region49: #{segment_loss.1} parent=39 // pred_check
        %p2088 = pneg %p666
      $region50: #{segment_loss.1} parent=39 // pred_check_branch
        %2090 = sbr.rel (%p2088) target = $region52
      $region51: #{segment_loss.1} parent=39 // pred_region
        %v2091 = vld [vmem:[#allocation2] sm:$0xff]
        %v2092 = vld [vmem:[#allocation2 + $0x8] sm:$0xff]
        %v2093 = vld [vmem:[#allocation2 + $0x10] sm:$0xff]
        %v2094 = vld [vmem:[#allocation2 + $0x18] sm:$0xff]
        %v2095 = vld [vmem:[#allocation2 + $0x20] sm:$0xff]
        %v2096 = vld [vmem:[#allocation2 + $0x28] sm:$0xff]
        %v2097 = vld [vmem:[#allocation2 + $0x30] sm:$0xff]
        %v2098 = vld [vmem:[#allocation2 + $0x38] sm:$0xff]
        %v2099 = vld [vmem:[#allocation2 + $0x40] sm:$0xff]
        %v2100 = vld [vmem:[#allocation2 + $0x48] sm:$0xff]
        %v2101 = vld [vmem:[#allocation2 + $0x50] sm:$0xff]
        %v2102 = vld [vmem:[#allocation2 + $0x58] sm:$0xff]
        %v2103 = vld [vmem:[#allocation2 + $0x60] sm:$0xff]
        %v2104 = vld [vmem:[#allocation2 + $0x68] sm:$0xff]
        %v2105 = vld [vmem:[#allocation2 + $0x70] sm:$0xff]
        %v2106 = vld [vmem:[#allocation2 + $0x78] sm:$0xff]
        %v2107 = vadd.f32 %v2091, %v2092
        %v2108 = vadd.f32 %v2107, %v2093
        %v2109 = vadd.f32 %v2108, %v2094
        %v2110 = vadd.f32 %v2109, %v2095
        %v2111 = vadd.f32 %v2110, %v2096
        %v2112 = vadd.f32 %v2111, %v2097
        %v2113 = vadd.f32 %v2112, %v2098
        %v2114 = vadd.f32 %v2113, %v2099
        %v2115 = vadd.f32 %v2114, %v2100
        %v2116 = vadd.f32 %v2115, %v2101
        %v2117 = vadd.f32 %v2116, %v2102
        %v2118 = vadd.f32 %v2117, %v2103
        %v2119 = vadd.f32 %v2118, %v2104
        %v2120 = vadd.f32 %v2119, %v2105
        %v2121 = vadd.f32 %v2120, %v2106
        %2122 = vst [vmem:[%s665] sm:$0xff] %v2121
      $region52: #{segment_loss.1} parent=39 // pred_fallthru
        _
      %p2123 = scmp.lt.s32.totalorder %s32, 1
      %s2124 = scalar_select %p2123, %s32, 1
      %s2125 = smul.addr %s2124, 8
      %s2126 = scalar_lea.vmem %s7, %s2125
      // Predicated region
      $region53: #{segment_loss.1} parent=39 // pred_check
        %p2127 = pneg %p276
      $region54: #{segment_loss.1} parent=39 // pred_check_branch
        %2129 = sbr.rel (%p2127) target = $region56
      $region55: #{segment_loss.1} parent=39 // pred_region
        _
      $region56: #{segment_loss.1} parent=39 // pred_fallthru
        _
    $region40: #{segment_loss.1} parent=5 // pred_fallthru
      _
    %p2130 = scmp.le.s32.totalorder 2, %s23
    // Predicated region
    $region57: #{segment_loss.1} parent=5 // pred_check
      %p2131 = pneg %p2130
    $region58: #{segment_loss.1} parent=5 // pred_check_branch
      %2133 = sbr.rel (%p2131) target = $region60
    $region59: #{segment_loss.1} parent=5 // pred_region
      %s2134 = ssub.s32 %s23, 2
      // Predicated region
      $region61: #{segment_loss.1} parent=59 // pred_check
        %p2135 = pneg %p282
      $region62: #{segment_loss.1} parent=59 // pred_check_branch
        %2137 = sbr.rel (%p2135) target = $region64
      $region63: #{segment_loss.1} parent=59 // pred_region
        %p2138 = scmp.lt.s32.totalorder %s34, 1
        %s2139 = scalar_select %p2138, %s34, 1
        %s2140 = smul.addr %s2139, 8
        %s2141 = scalar_lea.vmem %s7, %s2140
      $region64: #{segment_loss.1} parent=59 // pred_fallthru
        _
    $region60: #{segment_loss.1} parent=5 // pred_fallthru
      _
  $region6: #{segment_loss.1} parent=0 // loop_footer
    %s27 = sadd.s32 1, %s23
  $region7: #{segment_loss.1} parent=0 // loop_footer_branch
    %22 = sbr.rel target = $region3
  $region8: #{segment_loss.1} parent=0 // loop_exit
    _

</llo_original>
